<compile_context>
chip_gen: v5e
topology: v5e:2x2
jax: 0.10.0
libtpu: 0.0.40
codegen_flags: <defaults>
</compile_context>

<pallas_src>
import math

import jax
import jax.numpy as jnp
from jax import lax
from jax.experimental import pallas as pl
from jax.experimental.pallas import tpu as pltpu

_LN2 = math.log(2.0)
_LANE = 128
_SUBLANE = 8


def _round_up(x, m):
    return (x + m - 1) // m * m


def _shifted_softplus(x):
    # log(1 + exp(x)) - log(2), in a numerically stable form using only exp/log/abs/max.
    return jnp.maximum(x, 0.0) + jnp.log(1.0 + jnp.exp(-jnp.abs(x))) - _LN2


def _make_kernel(*, n_edges, te, n_pad, f_pad, compute_dtype, use_take_gather):
    cdt = compute_dtype

    def kernel(row_ref, col_ref, x_ref, attr_ref,
               w1_ref, wm1_ref, bm1_ref, wm2_ref, bm2_ref, w2_ref, b2_ref,
               out_ref, h_ref, aggr_ref):
        pid = pl.program_id(0)

        # ---- once: h = lin1(x) into VMEM scratch, zero the accumulator ----------
        @pl.when(pid == 0)
        def _init():
            h_ref[...] = jnp.dot(x_ref[...].astype(cdt), w1_ref[...].astype(cdt),
                                 preferred_element_type=jnp.float32)
            aggr_ref[...] = jnp.zeros_like(aggr_ref)

        # ---- filter network on this edge tile: Linear -> ShiftedSoftplus -> Linear
        t = jnp.dot(attr_ref[...].astype(cdt), wm1_ref[...].astype(cdt),
                    preferred_element_type=jnp.float32) + bm1_ref[...]
        t = _shifted_softplus(t)
        filt = jnp.dot(t.astype(cdt), wm2_ref[...].astype(cdt),
                       preferred_element_type=jnp.float32) + bm2_ref[...]

        # mask edges that are pure padding (beyond the true edge count)
        eidx = pid * te + lax.broadcasted_iota(jnp.int32, (te, 1), 0)
        filt = filt * (eidx < n_edges).astype(jnp.float32)

        # ---- per-tile one-hot of the scatter indices, synthesized in-kernel -----
        ridx = row_ref[...]                                   # [te, 1] int32
        cidx = col_ref[...]
        node_iota = lax.broadcasted_iota(jnp.int32, (te, n_pad), 1)
        oh_row = (node_iota == ridx).astype(cdt)              # [te, n_pad]
        oh_col = (node_iota == cidx).astype(cdt)

        # ---- gather h[row], h[col] from the VMEM-resident node features ---------
        h = h_ref[...]                                        # [n_pad, f_pad] f32
        if use_take_gather:
            x_row = jnp.take_along_axis(h, jnp.broadcast_to(ridx, (te, f_pad)),
                                        axis=0, mode="promise_in_bounds")
            x_col = jnp.take_along_axis(h, jnp.broadcast_to(cidx, (te, f_pad)),
                                        axis=0, mode="promise_in_bounds")
        else:
            # fallback: one-hot-matmul gather (always lowers; exact for 0/1 weights)
            hc = h.astype(cdt)
            x_row = jnp.dot(oh_row, hc, preferred_element_type=jnp.float32)
            x_col = jnp.dot(oh_col, hc, preferred_element_type=jnp.float32)

        msg1 = (filt * x_row).astype(cdt)                     # scattered onto col
        msg2 = (filt * x_col).astype(cdt)                     # scattered onto row

        # ---- scatter-add via transposed-LHS contraction on the edge axis --------
        dn = (((0,), (0,)), ((), ()))                         # oh^T @ msg on the MXU
        aggr_ref[...] += (
            lax.dot_general(oh_col, msg1, dn, preferred_element_type=jnp.float32)
            + lax.dot_general(oh_row, msg2, dn, preferred_element_type=jnp.float32))

        # ---- last tile: out = lin2(aggr) -----------------------------------------
        @pl.when(pid == pl.num_programs(0) - 1)
        def _finalize():
            out_ref[...] = (
                jnp.dot(aggr_ref[...].astype(cdt), w2_ref[...].astype(cdt),
                        preferred_element_type=jnp.float32)
                + b2_ref[...]).astype(out_ref.dtype)

    return kernel


def schconv_forward(params, x, edge_index, edge_weight, edge_attr, r_cut, *,
                    te=256, compute_dtype=jnp.bfloat16):
    n, cin = x.shape
    e = edge_index.shape[1]
    de = edge_attr.shape[1]
    f = params["w1"].shape[1]
    cout = params["w2"].shape[1]

    # C is computed but never used in the reference forward (dead code); kept as glue.
    _ = 0.5 * (jnp.cos(edge_weight * jnp.pi / r_cut) + 1.0)

    # Lane/sublane padding (zero padding is exact: padded lanes/rows stay zero,
    # padded edges are masked in-kernel, padded output rows/cols are sliced off).
    n_p = _round_up(n, _SUBLANE)
    cin_p = _round_up(cin, _LANE)
    de_p = _round_up(de, _LANE)
    f_p = _round_up(f, _LANE)
    cout_p = _round_up(cout, _LANE)
    # TODO(synk): re-derive `te` per TPU generation (v7x has 64 MiB VMEM vs 128 MiB).
    te = _round_up(min(te, _round_up(e, _SUBLANE)), _SUBLANE)
    e_p = _round_up(e, te)
    n_tiles = e_p // te

    f32 = jnp.float32

    def pad2(a, r, c):
        a = jnp.asarray(a, f32)
        return jnp.pad(a, ((0, r - a.shape[0]), (0, c - a.shape[1])))

    x_p = pad2(x, n_p, cin_p)
    attr_p = pad2(edge_attr, e_p, de_p)
    row_p = jnp.pad(edge_index[0].astype(jnp.int32), (0, e_p - e)).reshape(e_p, 1)
    col_p = jnp.pad(edge_index[1].astype(jnp.int32), (0, e_p - e)).reshape(e_p, 1)

    w1 = pad2(params["w1"], cin_p, f_p)
    wm1 = pad2(params["wm1"], de_p, f_p)
    bm1 = pad2(params["bm1"], 1, f_p)
    wm2 = pad2(params["wm2"], f_p, f_p)
    bm2 = pad2(params["bm2"], 1, f_p)
    w2 = pad2(params["w2"], f_p, cout_p)
    b2 = pad2(params["b2"], 1, cout_p)

    inputs = (row_p, col_p, x_p, attr_p, w1, wm1, bm1, wm2, bm2, w2, b2)

    edge_block = lambda i: (i, 0)     # tiled along the edge axis
    const_block = lambda i: (0, 0)    # resident across the whole grid

    in_specs = [
        pl.BlockSpec((te, 1), edge_block),          # row indices
        pl.BlockSpec((te, 1), edge_block),          # col indices
        pl.BlockSpec((n_p, cin_p), const_block),    # x
        pl.BlockSpec((te, de_p), edge_block),       # edge_attr
        pl.BlockSpec((cin_p, f_p), const_block),    # lin1 weight
        pl.BlockSpec((de_p, f_p), const_block),     # mlp layer-1 weight
        pl.BlockSpec((1, f_p), const_block),        # mlp layer-1 bias
        pl.BlockSpec((f_p, f_p), const_block),      # mlp layer-2 weight
        pl.BlockSpec((1, f_p), const_block),        # mlp layer-2 bias
        pl.BlockSpec((f_p, cout_p), const_block),   # lin2 weight
        pl.BlockSpec((1, cout_p), const_block),     # lin2 bias
    ]
    out_spec = pl.BlockSpec((n_p, cout_p), const_block)

    scratch_shapes = [
        pltpu.VMEM((n_p, f_p), f32),   # h = lin1(x), computed once
        pltpu.VMEM((n_p, f_p), f32),   # aggr accumulator
    ]

    # Cost hint for XLA's scheduler around the custom call.
    flops = (2 * n_p * cin_p * f_p                    # lin1
             + 2 * e_p * (de_p * f_p + f_p * f_p)     # filter MLP
             + 4 * e_p * n_p * f_p                    # scatter matmuls
             + 2 * n_p * f_p * cout_p)                # lin2
    bytes_accessed = sum(int(a.size) * 4 for a in inputs) + n_p * cout_p * 4
    cost = pl.CostEstimate(flops=int(flops),
                           transcendentals=int(2 * e_p * f_p),
                           bytes_accessed=int(bytes_accessed))

    # VMEM budget: resident weights/x/out + double-buffered edge tiles + scratches.
    vmem_need = (
        sum(int(a.size) * 4 for a in (x_p, w1, wm1, bm1, wm2, bm2, w2, b2))
        + 2 * (te * de_p + 2 * te) * 4
        + 2 * n_p * f_p * 4
        + n_p * cout_p * 4)
    vmem_limit = int(min(64 * 2 ** 20, max(8 * 2 ** 20, 2 * vmem_need)))

    def run(use_take_gather):
        kernel = _make_kernel(n_edges=e, te=te, n_pad=n_p, f_pad=f_p,
                              compute_dtype=compute_dtype,
                              use_take_gather=use_take_gather)
        out = pl.pallas_call(
            kernel,
            out_shape=jax.ShapeDtypeStruct((n_p, cout_p), f32),
            grid=(n_tiles,),
            in_specs=in_specs,
            out_specs=out_spec,
            scratch_shapes=scratch_shapes,
            compiler_params=pltpu.CompilerParams(
                dimension_semantics=("arbitrary",),   # edge axis carries the accumulator
                vmem_limit_bytes=vmem_limit),
            cost_estimate=cost,
        )(*inputs)
        return jax.block_until_ready(out)

    try:
        out_p = run(use_take_gather=True)
    except Exception:
        # Older Mosaic builds may not lower the sublane take_along_axis gather;
        # the one-hot-matmul gather is mathematically identical.
        out_p = run(use_take_gather=False)

    return out_p[:n, :cout]


def _reference(params, x, edge_index, edge_weight, edge_attr, r_cut):
    # pure-JAX reference mirroring the PyTorch forward (for sanity check)
    row, col = edge_index[0], edge_index[1]
    _ = 0.5 * (jnp.cos(edge_weight * jnp.pi / r_cut) + 1.0)   # unused, as in reference
    h = x @ params["w1"]
    t = jax.nn.softplus(edge_attr @ params["wm1"] + params["bm1"]) - _LN2
    filt = t @ params["wm2"] + params["bm2"]
    msg1 = filt * h[row]
    msg2 = filt * h[col]
    n = x.shape[0]
    aggr = (jax.ops.segment_sum(msg1, col, num_segments=n)
            + jax.ops.segment_sum(msg2, row, num_segments=n))
    return aggr @ params["w2"] + params["b2"]


if __name__ == "__main__":
    # small shapes consistent with the module
    N, E = 8, 16          # nodes, edges
    CIN, F, COUT = 16, 32, 16
    DE = 16               # edge_attr feature dim (e.g. RBF expansion size)
    R_CUT = 5.0

    key = jax.random.PRNGKey(0)
    ks = jax.random.split(key, 10)

    scale = 0.1
    params = {
        "w1":  scale * jax.random.normal(ks[0], (CIN, F), jnp.float32),   # lin1 (no bias)
        "wm1": scale * jax.random.normal(ks[1], (DE, F), jnp.float32),    # mlp layer 1
        "bm1": scale * jax.random.normal(ks[2], (1, F), jnp.float32),
        "wm2": scale * jax.random.normal(ks[3], (F, F), jnp.float32),     # mlp layer 2
        "bm2": scale * jax.random.normal(ks[4], (1, F), jnp.float32),
        "w2":  scale * jax.random.normal(ks[5], (F, COUT), jnp.float32),  # lin2
        "b2":  scale * jax.random.normal(ks[6], (1, COUT), jnp.float32),
    }

    x = jax.random.normal(ks[7], (N, CIN), jnp.float32)
    edge_index = jax.random.randint(ks[8], (2, E), 0, N, dtype=jnp.int32)
    edge_weight = jax.random.uniform(ks[9], (E,), jnp.float32, 0.1, R_CUT)
    edge_attr = jax.random.normal(jax.random.fold_in(key, 99), (E, DE), jnp.float32)

    # te=8 exercises the multi-tile accumulation path on this toy edge count.
    out = schconv_forward(params, x, edge_index, edge_weight, edge_attr, R_CUT,
                          te=8, compute_dtype=jnp.bfloat16)
    out = jax.block_until_ready(out)

    ref = _reference(params, x, edge_index, edge_weight, edge_attr, R_CUT)
    assert out.shape == (N, COUT)
    # bf16 MXU operands (f32 accumulation) => loosened tolerance vs the f32 reference.
    assert jnp.allclose(out, ref, atol=2e-2, rtol=2e-2), "mismatch vs JAX reference"

    print("KERNEL_OK")
</pallas_src>

<mosaic_0001>
module attributes {stable_mosaic.version = 11 : i64} {
  func.func @kernel(%arg0: i32, %arg1: memref<8x1xi32, #tpu.memory_space<vmem>>, %arg2: memref<8x1xi32, #tpu.memory_space<vmem>>, %arg3: memref<8x128xf32, #tpu.memory_space<vmem>>, %arg4: memref<8x128xf32, #tpu.memory_space<vmem>>, %arg5: memref<128x128xf32, #tpu.memory_space<vmem>>, %arg6: memref<128x128xf32, #tpu.memory_space<vmem>>, %arg7: memref<1x128xf32, #tpu.memory_space<vmem>>, %arg8: memref<128x128xf32, #tpu.memory_space<vmem>>, %arg9: memref<1x128xf32, #tpu.memory_space<vmem>>, %arg10: memref<128x128xf32, #tpu.memory_space<vmem>>, %arg11: memref<1x128xf32, #tpu.memory_space<vmem>>, %arg12: memref<8x128xf32, #tpu.memory_space<vmem>>, %arg13: memref<8x128xf32, #tpu.memory_space<vmem>>, %arg14: memref<8x128xf32, #tpu.memory_space<vmem>>) attributes {dimension_semantics = [#tpu.dimension_semantics<arbitrary>], iteration_bounds = array<i64: 2>, scalar_prefetch = 0 : i64, scratch_operands = 2 : i64, tpu.core_type = #tpu.core_type<tc>, window_params = [{transform_indices = @transform_0, window_bounds = array<i64: 8, 1>}, {transform_indices = @transform_1, window_bounds = array<i64: 8, 1>}, {pipeline_mode = #tpu.pipeline_mode<synchronous>, transform_indices = @transform_2, window_bounds = array<i64: 8, 128>}, {transform_indices = @transform_3, window_bounds = array<i64: 8, 128>}, {pipeline_mode = #tpu.pipeline_mode<synchronous>, transform_indices = @transform_4, window_bounds = array<i64: 128, 128>}, {pipeline_mode = #tpu.pipeline_mode<synchronous>, transform_indices = @transform_5, window_bounds = array<i64: 128, 128>}, {pipeline_mode = #tpu.pipeline_mode<synchronous>, transform_indices = @transform_6, window_bounds = array<i64: 1, 128>}, {pipeline_mode = #tpu.pipeline_mode<synchronous>, transform_indices = @transform_7, window_bounds = array<i64: 128, 128>}, {pipeline_mode = #tpu.pipeline_mode<synchronous>, transform_indices = @transform_8, window_bounds = array<i64: 1, 128>}, {pipeline_mode = #tpu.pipeline_mode<synchronous>, transform_indices = @transform_9, window_bounds = array<i64: 128, 128>}, {pipeline_mode = #tpu.pipeline_mode<synchronous>, transform_indices = @transform_10, window_bounds = array<i64: 1, 128>}, {pipeline_mode = #tpu.pipeline_mode<synchronous>, transform_indices = @transform_11, window_bounds = array<i64: 8, 128>}]} {
    %c0_i32 = arith.constant 0 : i32
    %0 = arith.cmpi eq, %arg0, %c0_i32 : i32
    %1 = arith.extui %0 : i1 to i32
    %c0_i32_0 = arith.constant 0 : i32
    %2 = arith.cmpi ne, %1, %c0_i32_0 : i32
    scf.if %2 {
      %c0_28 = arith.constant 0 : index
      %c0_29 = arith.constant 0 : index
      %77 = vector.load %arg3[%c0_28, %c0_29] : memref<8x128xf32, #tpu.memory_space<vmem>>, vector<8x128xf32>
      %78 = arith.truncf %77 : vector<8x128xf32> to vector<8x128xbf16>
      %c0_30 = arith.constant 0 : index
      %c0_31 = arith.constant 0 : index
      %79 = vector.load %arg5[%c0_30, %c0_31] : memref<128x128xf32, #tpu.memory_space<vmem>>, vector<128x128xf32>
      %80 = arith.truncf %79 : vector<128x128xf32> to vector<128x128xbf16>
      %cst_32 = arith.constant dense<0.000000e+00> : vector<8x128xf32>
      %81 = tpu.matmul %78, %80, %cst_32 {dimension_numbers = #tpu.dot_dimension_numbers<[1], [0], [0], [1], [0, 0, 1, 1], [], []>} : vector<8x128xbf16>, vector<128x128xbf16>, vector<8x128xf32> -> vector<8x128xf32>
      %c0_33 = arith.constant 0 : index
      %c0_34 = arith.constant 0 : index
      %82 = vector.load %arg13[%c0_33, %c0_34] : memref<8x128xf32, #tpu.memory_space<vmem>>, vector<8x128xf32>
      tpu.vector_store %arg13[%c0_33, %c0_34], %81 {strides = array<i32>} : memref<8x128xf32, #tpu.memory_space<vmem>>, vector<8x128xf32>,
      %cst_35 = arith.constant 0.000000e+00 : f32
      %83 = vector.broadcast %cst_35 : f32 to vector<8x128xf32>
      %c0_36 = arith.constant 0 : index
      %c0_37 = arith.constant 0 : index
      %84 = vector.load %arg14[%c0_36, %c0_37] : memref<8x128xf32, #tpu.memory_space<vmem>>, vector<8x128xf32>
      tpu.vector_store %arg14[%c0_36, %c0_37], %83 {strides = array<i32>} : memref<8x128xf32, #tpu.memory_space<vmem>>, vector<8x128xf32>,
    } else {
    }
    %c0 = arith.constant 0 : index
    %c0_1 = arith.constant 0 : index
    %3 = vector.load %arg4[%c0, %c0_1] : memref<8x128xf32, #tpu.memory_space<vmem>>, vector<8x128xf32>
    %4 = arith.truncf %3 : vector<8x128xf32> to vector<8x128xbf16>
    %c0_2 = arith.constant 0 : index
    %c0_3 = arith.constant 0 : index
    %5 = vector.load %arg6[%c0_2, %c0_3] : memref<128x128xf32, #tpu.memory_space<vmem>>, vector<128x128xf32>
    %6 = arith.truncf %5 : vector<128x128xf32> to vector<128x128xbf16>
    %cst = arith.constant dense<0.000000e+00> : vector<8x128xf32>
    %7 = tpu.matmul %4, %6, %cst {dimension_numbers = #tpu.dot_dimension_numbers<[1], [0], [0], [1], [0, 0, 1, 1], [], []>} : vector<8x128xbf16>, vector<128x128xbf16>, vector<8x128xf32> -> vector<8x128xf32>
    %c0_4 = arith.constant 0 : index
    %c0_5 = arith.constant 0 : index
    %8 = vector.load %arg7[%c0_4, %c0_5] : memref<1x128xf32, #tpu.memory_space<vmem>>, vector<1x128xf32>
    %9 = vector.broadcast %8 : vector<1x128xf32> to vector<8x128xf32>
    %10 = arith.addf %7, %9 : vector<8x128xf32>
    %cst_6 = arith.constant 0.000000e+00 : f32
    %11 = vector.broadcast %cst_6 : f32 to vector<8x128xf32>
    %12 = arith.maximumf %10, %11 : vector<8x128xf32>
    %13 = math.absf %10 : vector<8x128xf32>
    %cst_7 = arith.constant 0.000000e+00 : f32
    %14 = vector.broadcast %cst_7 : f32 to vector<8x128xf32>
    %15 = arith.subf %14, %13 : vector<8x128xf32>
    %16 = math.exp %15 : vector<8x128xf32>
    %cst_8 = arith.constant 1.000000e+00 : f32
    %17 = vector.broadcast %cst_8 : f32 to vector<8x128xf32>
    %18 = arith.addf %17, %16 : vector<8x128xf32>
    %19 = math.log %18 : vector<8x128xf32>
    %20 = arith.addf %12, %19 : vector<8x128xf32>
    %cst_9 = arith.constant 0.693147182 : f32
    %21 = vector.broadcast %cst_9 : f32 to vector<8x128xf32>
    %22 = arith.subf %20, %21 : vector<8x128xf32>
    %23 = arith.truncf %22 : vector<8x128xf32> to vector<8x128xbf16>
    %c0_10 = arith.constant 0 : index
    %c0_11 = arith.constant 0 : index
    %24 = vector.load %arg8[%c0_10, %c0_11] : memref<128x128xf32, #tpu.memory_space<vmem>>, vector<128x128xf32>
    %25 = arith.truncf %24 : vector<128x128xf32> to vector<128x128xbf16>
    %cst_12 = arith.constant dense<0.000000e+00> : vector<8x128xf32>
    %26 = tpu.matmul %23, %25, %cst_12 {dimension_numbers = #tpu.dot_dimension_numbers<[1], [0], [0], [1], [0, 0, 1, 1], [], []>} : vector<8x128xbf16>, vector<128x128xbf16>, vector<8x128xf32> -> vector<8x128xf32>
    %c0_13 = arith.constant 0 : index
    %c0_14 = arith.constant 0 : index
    %27 = vector.load %arg9[%c0_13, %c0_14] : memref<1x128xf32, #tpu.memory_space<vmem>>, vector<1x128xf32>
    %28 = vector.broadcast %27 : vector<1x128xf32> to vector<8x128xf32>
    %29 = arith.addf %26, %28 : vector<8x128xf32>
    %c8_i32 = arith.constant 8 : i32
    %30 = arith.muli %arg0, %c8_i32 : i32
    %31 = tpu.iota {dimensions = array<i32: 0>} : vector<8x1xi32>
    %32 = vector.broadcast %30 : i32 to vector<8x1xi32>
    %33 = arith.addi %32, %31 : vector<8x1xi32>
    %c16_i32 = arith.constant 16 : i32
    %34 = vector.broadcast %c16_i32 : i32 to vector<8x1xi32>
    %35 = arith.cmpi slt, %33, %34 : vector<8x1xi32>
    %36 = arith.extui %35 : vector<8x1xi1> to vector<8x1xi32>
    %37 = arith.sitofp %36 : vector<8x1xi32> to vector<8x1xf32>
    %38 = vector.broadcast %37 : vector<8x1xf32> to vector<8x128xf32>
    %39 = arith.mulf %29, %38 : vector<8x128xf32>
    %c0_15 = arith.constant 0 : index
    %c0_16 = arith.constant 0 : index
    %40 = vector.load %arg1[%c0_15, %c0_16] : memref<8x1xi32, #tpu.memory_space<vmem>>, vector<8x1xi32>
    %c0_17 = arith.constant 0 : index
    %c0_18 = arith.constant 0 : index
    %41 = vector.load %arg2[%c0_17, %c0_18] : memref<8x1xi32, #tpu.memory_space<vmem>>, vector<8x1xi32>
    %42 = tpu.iota {dimensions = array<i32: 1>} : vector<8x8xi32>
    %43 = vector.broadcast %40 : vector<8x1xi32> to vector<8x8xi32>
    %44 = arith.cmpi eq, %42, %43 : vector<8x8xi32>
    %45 = arith.extui %44 : vector<8x8xi1> to vector<8x8xi32>
    %46 = arith.sitofp %45 : vector<8x8xi32> to vector<8x8xf32>
    %47 = arith.truncf %46 : vector<8x8xf32> to vector<8x8xbf16>
    %48 = vector.broadcast %41 : vector<8x1xi32> to vector<8x8xi32>
    %49 = arith.cmpi eq, %42, %48 : vector<8x8xi32>
    %50 = arith.extui %49 : vector<8x8xi1> to vector<8x8xi32>
    %51 = arith.sitofp %50 : vector<8x8xi32> to vector<8x8xf32>
    %52 = arith.truncf %51 : vector<8x8xf32> to vector<8x8xbf16>
    %c0_19 = arith.constant 0 : index
    %c0_20 = arith.constant 0 : index
    %53 = vector.load %arg13[%c0_19, %c0_20] : memref<8x128xf32, #tpu.memory_space<vmem>>, vector<8x128xf32>
    %54 = vector.shape_cast %40 : vector<8x1xi32> to vector<8x1xi32>
    %55 = vector.broadcast %54 : vector<8x1xi32> to vector<8x128xi32>
    %56 = vector.shape_cast %55 : vector<8x128xi32> to vector<8x128x1xi32>
    %57 = vector.shape_cast %56 : vector<8x128x1xi32> to vector<8x128xi32>
    %58 = tpu.dynamic_gather %53[%57] in [0] : vector<8x128xf32>, vector<8x128xi32> -> vector<8x128xf32>
    %59 = vector.shape_cast %41 : vector<8x1xi32> to vector<8x1xi32>
    %60 = vector.broadcast %59 : vector<8x1xi32> to vector<8x128xi32>
    %61 = vector.shape_cast %60 : vector<8x128xi32> to vector<8x128x1xi32>
    %62 = vector.shape_cast %61 : vector<8x128x1xi32> to vector<8x128xi32>
    %63 = tpu.dynamic_gather %53[%62] in [0] : vector<8x128xf32>, vector<8x128xi32> -> vector<8x128xf32>
    %64 = arith.mulf %39, %58 : vector<8x128xf32>
    %65 = arith.truncf %64 : vector<8x128xf32> to vector<8x128xbf16>
    %66 = arith.mulf %39, %63 : vector<8x128xf32>
    %67 = arith.truncf %66 : vector<8x128xf32> to vector<8x128xbf16>
    %c0_21 = arith.constant 0 : index
    %c0_22 = arith.constant 0 : index
    %68 = vector.load %arg14[%c0_21, %c0_22] : memref<8x128xf32, #tpu.memory_space<vmem>>, vector<8x128xf32>
    %cst_23 = arith.constant dense<0.000000e+00> : vector<8x128xf32>
    %69 = tpu.matmul %52, %65, %cst_23 {dimension_numbers = #tpu.dot_dimension_numbers<[0], [0], [1], [1], [0, 1, 1, 1], [], []>} : vector<8x8xbf16>, vector<8x128xbf16>, vector<8x128xf32> -> vector<8x128xf32>
    %cst_24 = arith.constant dense<0.000000e+00> : vector<8x128xf32>
    %70 = tpu.matmul %47, %67, %cst_24 {dimension_numbers = #tpu.dot_dimension_numbers<[0], [0], [1], [1], [0, 1, 1, 1], [], []>} : vector<8x8xbf16>, vector<8x128xbf16>, vector<8x128xf32> -> vector<8x128xf32>
    %71 = arith.addf %69, %70 : vector<8x128xf32>
    %72 = arith.addf %68, %71 : vector<8x128xf32>
    %c0_25 = arith.constant 0 : index
    %c0_26 = arith.constant 0 : index
    %73 = vector.load %arg14[%c0_25, %c0_26] : memref<8x128xf32, #tpu.memory_space<vmem>>, vector<8x128xf32>
    tpu.vector_store %arg14[%c0_25, %c0_26], %72 {strides = array<i32>} : memref<8x128xf32, #tpu.memory_space<vmem>>, vector<8x128xf32>,
    %c1_i32 = arith.constant 1 : i32
    %74 = arith.cmpi eq, %arg0, %c1_i32 : i32
    %75 = arith.extui %74 : i1 to i32
    %c0_i32_27 = arith.constant 0 : i32
    %76 = arith.cmpi ne, %75, %c0_i32_27 : i32
    scf.if %76 {
      %c0_28 = arith.constant 0 : index
      %c0_29 = arith.constant 0 : index
      %77 = vector.load %arg14[%c0_28, %c0_29] : memref<8x128xf32, #tpu.memory_space<vmem>>, vector<8x128xf32>
      %78 = arith.truncf %77 : vector<8x128xf32> to vector<8x128xbf16>
      %c0_30 = arith.constant 0 : index
      %c0_31 = arith.constant 0 : index
      %79 = vector.load %arg10[%c0_30, %c0_31] : memref<128x128xf32, #tpu.memory_space<vmem>>, vector<128x128xf32>
      %80 = arith.truncf %79 : vector<128x128xf32> to vector<128x128xbf16>
      %cst_32 = arith.constant dense<0.000000e+00> : vector<8x128xf32>
      %81 = tpu.matmul %78, %80, %cst_32 {dimension_numbers = #tpu.dot_dimension_numbers<[1], [0], [0], [1], [0, 0, 1, 1], [], []>} : vector<8x128xbf16>, vector<128x128xbf16>, vector<8x128xf32> -> vector<8x128xf32>
      %c0_33 = arith.constant 0 : index
      %c0_34 = arith.constant 0 : index
      %82 = vector.load %arg11[%c0_33, %c0_34] : memref<1x128xf32, #tpu.memory_space<vmem>>, vector<1x128xf32>
      %83 = vector.broadcast %82 : vector<1x128xf32> to vector<8x128xf32>
      %84 = arith.addf %81, %83 : vector<8x128xf32>
      %c0_35 = arith.constant 0 : index
      %c0_36 = arith.constant 0 : index
      %85 = vector.load %arg12[%c0_35, %c0_36] : memref<8x128xf32, #tpu.memory_space<vmem>>, vector<8x128xf32>
      tpu.vector_store %arg12[%c0_35, %c0_36], %84 {strides = array<i32>} : memref<8x128xf32, #tpu.memory_space<vmem>>, vector<8x128xf32>,
    } else {
    }
    return
  }
  func.func @transform_0(%arg0: i32) -> (i32, i32) {
    %c0_i32 = arith.constant 0 : i32
    %c0_i32_0 = arith.constant 0 : i32
    return %arg0, %c0_i32 : i32, i32
  }
  func.func @transform_1(%arg0: i32) -> (i32, i32) {
    %c0_i32 = arith.constant 0 : i32
    %c0_i32_0 = arith.constant 0 : i32
    return %arg0, %c0_i32 : i32, i32
  }
  func.func @transform_2(%arg0: i32) -> (i32, i32) {
    %c0_i32 = arith.constant 0 : i32
    %c0_i32_0 = arith.constant 0 : i32
    %c0_i32_1 = arith.constant 0 : i32
    return %c0_i32, %c0_i32_0 : i32, i32
  }
  func.func @transform_3(%arg0: i32) -> (i32, i32) {
    %c0_i32 = arith.constant 0 : i32
    %c0_i32_0 = arith.constant 0 : i32
    return %arg0, %c0_i32 : i32, i32
  }
  func.func @transform_4(%arg0: i32) -> (i32, i32) {
    %c0_i32 = arith.constant 0 : i32
    %c0_i32_0 = arith.constant 0 : i32
    %c0_i32_1 = arith.constant 0 : i32
    return %c0_i32, %c0_i32_0 : i32, i32
  }
  func.func @transform_5(%arg0: i32) -> (i32, i32) {
    %c0_i32 = arith.constant 0 : i32
    %c0_i32_0 = arith.constant 0 : i32
    %c0_i32_1 = arith.constant 0 : i32
    return %c0_i32, %c0_i32_0 : i32, i32
  }
  func.func @transform_6(%arg0: i32) -> (i32, i32) {
    %c0_i32 = arith.constant 0 : i32
    %c0_i32_0 = arith.constant 0 : i32
    %c0_i32_1 = arith.constant 0 : i32
    return %c0_i32, %c0_i32_0 : i32, i32
  }
  func.func @transform_7(%arg0: i32) -> (i32, i32) {
    %c0_i32 = arith.constant 0 : i32
    %c0_i32_0 = arith.constant 0 : i32
    %c0_i32_1 = arith.constant 0 : i32
    return %c0_i32, %c0_i32_0 : i32, i32
  }
  func.func @transform_8(%arg0: i32) -> (i32, i32) {
    %c0_i32 = arith.constant 0 : i32
    %c0_i32_0 = arith.constant 0 : i32
    %c0_i32_1 = arith.constant 0 : i32
    return %c0_i32, %c0_i32_0 : i32, i32
  }
  func.func @transform_9(%arg0: i32) -> (i32, i32) {
    %c0_i32 = arith.constant 0 : i32
    %c0_i32_0 = arith.constant 0 : i32
    %c0_i32_1 = arith.constant 0 : i32
    return %c0_i32, %c0_i32_0 : i32, i32
  }
  func.func @transform_10(%arg0: i32) -> (i32, i32) {
    %c0_i32 = arith.constant 0 : i32
    %c0_i32_0 = arith.constant 0 : i32
    %c0_i32_1 = arith.constant 0 : i32
    return %c0_i32, %c0_i32_0 : i32, i32
  }
  func.func @transform_11(%arg0: i32) -> (i32, i32) {
    %c0_i32 = arith.constant 0 : i32
    %c0_i32_0 = arith.constant 0 : i32
    %c0_i32_1 = arith.constant 0 : i32
    return %c0_i32, %c0_i32_0 : i32, i32
  }
}

module attributes {stable_mosaic.version = 11 : i64} {
  func.func @kernel(%arg0: i32, %arg1: memref<8x1xi32, #tpu.memory_space<vmem>>, %arg2: memref<8x1xi32, #tpu.memory_space<vmem>>, %arg3: memref<8x128xf32, #tpu.memory_space<vmem>>, %arg4: memref<8x128xf32, #tpu.memory_space<vmem>>, %arg5: memref<128x128xf32, #tpu.memory_space<vmem>>, %arg6: memref<128x128xf32, #tpu.memory_space<vmem>>, %arg7: memref<1x128xf32, #tpu.memory_space<vmem>>, %arg8: memref<128x128xf32, #tpu.memory_space<vmem>>, %arg9: memref<1x128xf32, #tpu.memory_space<vmem>>, %arg10: memref<128x128xf32, #tpu.memory_space<vmem>>, %arg11: memref<1x128xf32, #tpu.memory_space<vmem>>, %arg12: memref<8x128xf32, #tpu.memory_space<vmem>>, %arg13: memref<8x128xf32, #tpu.memory_space<vmem>>, %arg14: memref<8x128xf32, #tpu.memory_space<vmem>>) attributes {dimension_semantics = [#tpu.dimension_semantics<arbitrary>], iteration_bounds = array<i64: 2>, scalar_prefetch = 0 : i64, scratch_operands = 2 : i64, tpu.core_type = #tpu.core_type<tc>, window_params = [{transform_indices = @transform_0, window_bounds = array<i64: 8, 1>}, {transform_indices = @transform_1, window_bounds = array<i64: 8, 1>}, {pipeline_mode = #tpu.pipeline_mode<synchronous>, transform_indices = @transform_2, window_bounds = array<i64: 8, 128>}, {transform_indices = @transform_3, window_bounds = array<i64: 8, 128>}, {pipeline_mode = #tpu.pipeline_mode<synchronous>, transform_indices = @transform_4, window_bounds = array<i64: 128, 128>}, {pipeline_mode = #tpu.pipeline_mode<synchronous>, transform_indices = @transform_5, window_bounds = array<i64: 128, 128>}, {pipeline_mode = #tpu.pipeline_mode<synchronous>, transform_indices = @transform_6, window_bounds = array<i64: 1, 128>}, {pipeline_mode = #tpu.pipeline_mode<synchronous>, transform_indices = @transform_7, window_bounds = array<i64: 128, 128>}, {pipeline_mode = #tpu.pipeline_mode<synchronous>, transform_indices = @transform_8, window_bounds = array<i64: 1, 128>}, {pipeline_mode = #tpu.pipeline_mode<synchronous>, transform_indices = @transform_9, window_bounds = array<i64: 128, 128>}, {pipeline_mode = #tpu.pipeline_mode<synchronous>, transform_indices = @transform_10, window_bounds = array<i64: 1, 128>}, {pipeline_mode = #tpu.pipeline_mode<synchronous>, transform_indices = @transform_11, window_bounds = array<i64: 8, 128>}]} {
    %c0_i32 = arith.constant 0 : i32
    %0 = arith.cmpi eq, %arg0, %c0_i32 : i32
    %1 = arith.extui %0 : i1 to i32
    %c0_i32_0 = arith.constant 0 : i32
    %2 = arith.cmpi ne, %1, %c0_i32_0 : i32
    scf.if %2 {
      %c0_30 = arith.constant 0 : index
      %c0_31 = arith.constant 0 : index
      %70 = vector.load %arg3[%c0_30, %c0_31] : memref<8x128xf32, #tpu.memory_space<vmem>>, vector<8x128xf32>
      %71 = arith.truncf %70 : vector<8x128xf32> to vector<8x128xbf16>
      %c0_32 = arith.constant 0 : index
      %c0_33 = arith.constant 0 : index
      %72 = vector.load %arg5[%c0_32, %c0_33] : memref<128x128xf32, #tpu.memory_space<vmem>>, vector<128x128xf32>
      %73 = arith.truncf %72 : vector<128x128xf32> to vector<128x128xbf16>
      %cst_34 = arith.constant dense<0.000000e+00> : vector<8x128xf32>
      %74 = tpu.matmul %71, %73, %cst_34 {dimension_numbers = #tpu.dot_dimension_numbers<[1], [0], [0], [1], [0, 0, 1, 1], [], []>} : vector<8x128xbf16>, vector<128x128xbf16>, vector<8x128xf32> -> vector<8x128xf32>
      %c0_35 = arith.constant 0 : index
      %c0_36 = arith.constant 0 : index
      %75 = vector.load %arg13[%c0_35, %c0_36] : memref<8x128xf32, #tpu.memory_space<vmem>>, vector<8x128xf32>
      tpu.vector_store %arg13[%c0_35, %c0_36], %74 {strides = array<i32>} : memref<8x128xf32, #tpu.memory_space<vmem>>, vector<8x128xf32>,
      %cst_37 = arith.constant 0.000000e+00 : f32
      %76 = vector.broadcast %cst_37 : f32 to vector<8x128xf32>
      %c0_38 = arith.constant 0 : index
      %c0_39 = arith.constant 0 : index
      %77 = vector.load %arg14[%c0_38, %c0_39] : memref<8x128xf32, #tpu.memory_space<vmem>>, vector<8x128xf32>
      tpu.vector_store %arg14[%c0_38, %c0_39], %76 {strides = array<i32>} : memref<8x128xf32, #tpu.memory_space<vmem>>, vector<8x128xf32>,
    } else {
    }
    %c0 = arith.constant 0 : index
    %c0_1 = arith.constant 0 : index
    %3 = vector.load %arg4[%c0, %c0_1] : memref<8x128xf32, #tpu.memory_space<vmem>>, vector<8x128xf32>
    %4 = arith.truncf %3 : vector<8x128xf32> to vector<8x128xbf16>
    %c0_2 = arith.constant 0 : index
    %c0_3 = arith.constant 0 : index
    %5 = vector.load %arg6[%c0_2, %c0_3] : memref<128x128xf32, #tpu.memory_space<vmem>>, vector<128x128xf32>
    %6 = arith.truncf %5 : vector<128x128xf32> to vector<128x128xbf16>
    %cst = arith.constant dense<0.000000e+00> : vector<8x128xf32>
    %7 = tpu.matmul %4, %6, %cst {dimension_numbers = #tpu.dot_dimension_numbers<[1], [0], [0], [1], [0, 0, 1, 1], [], []>} : vector<8x128xbf16>, vector<128x128xbf16>, vector<8x128xf32> -> vector<8x128xf32>
    %c0_4 = arith.constant 0 : index
    %c0_5 = arith.constant 0 : index
    %8 = vector.load %arg7[%c0_4, %c0_5] : memref<1x128xf32, #tpu.memory_space<vmem>>, vector<1x128xf32>
    %9 = vector.broadcast %8 : vector<1x128xf32> to vector<8x128xf32>
    %10 = arith.addf %7, %9 : vector<8x128xf32>
    %cst_6 = arith.constant 0.000000e+00 : f32
    %11 = vector.broadcast %cst_6 : f32 to vector<8x128xf32>
    %12 = arith.maximumf %10, %11 : vector<8x128xf32>
    %13 = math.absf %10 : vector<8x128xf32>
    %cst_7 = arith.constant 0.000000e+00 : f32
    %14 = vector.broadcast %cst_7 : f32 to vector<8x128xf32>
    %15 = arith.subf %14, %13 : vector<8x128xf32>
    %16 = math.exp %15 : vector<8x128xf32>
    %cst_8 = arith.constant 1.000000e+00 : f32
    %17 = vector.broadcast %cst_8 : f32 to vector<8x128xf32>
    %18 = arith.addf %17, %16 : vector<8x128xf32>
    %19 = math.log %18 : vector<8x128xf32>
    %20 = arith.addf %12, %19 : vector<8x128xf32>
    %cst_9 = arith.constant 0.693147182 : f32
    %21 = vector.broadcast %cst_9 : f32 to vector<8x128xf32>
    %22 = arith.subf %20, %21 : vector<8x128xf32>
    %23 = arith.truncf %22 : vector<8x128xf32> to vector<8x128xbf16>
    %c0_10 = arith.constant 0 : index
    %c0_11 = arith.constant 0 : index
    %24 = vector.load %arg8[%c0_10, %c0_11] : memref<128x128xf32, #tpu.memory_space<vmem>>, vector<128x128xf32>
    %25 = arith.truncf %24 : vector<128x128xf32> to vector<128x128xbf16>
    %cst_12 = arith.constant dense<0.000000e+00> : vector<8x128xf32>
    %26 = tpu.matmul %23, %25, %cst_12 {dimension_numbers = #tpu.dot_dimension_numbers<[1], [0], [0], [1], [0, 0, 1, 1], [], []>} : vector<8x128xbf16>, vector<128x128xbf16>, vector<8x128xf32> -> vector<8x128xf32>
    %c0_13 = arith.constant 0 : index
    %c0_14 = arith.constant 0 : index
    %27 = vector.load %arg9[%c0_13, %c0_14] : memref<1x128xf32, #tpu.memory_space<vmem>>, vector<1x128xf32>
    %28 = vector.broadcast %27 : vector<1x128xf32> to vector<8x128xf32>
    %29 = arith.addf %26, %28 : vector<8x128xf32>
    %c8_i32 = arith.constant 8 : i32
    %30 = arith.muli %arg0, %c8_i32 : i32
    %31 = tpu.iota {dimensions = array<i32: 0>} : vector<8x1xi32>
    %32 = vector.broadcast %30 : i32 to vector<8x1xi32>
    %33 = arith.addi %32, %31 : vector<8x1xi32>
    %c16_i32 = arith.constant 16 : i32
    %34 = vector.broadcast %c16_i32 : i32 to vector<8x1xi32>
    %35 = arith.cmpi slt, %33, %34 : vector<8x1xi32>
    %36 = arith.extui %35 : vector<8x1xi1> to vector<8x1xi32>
    %37 = arith.sitofp %36 : vector<8x1xi32> to vector<8x1xf32>
    %38 = vector.broadcast %37 : vector<8x1xf32> to vector<8x128xf32>
    %39 = arith.mulf %29, %38 : vector<8x128xf32>
    %c0_15 = arith.constant 0 : index
    %c0_16 = arith.constant 0 : index
    %40 = vector.load %arg1[%c0_15, %c0_16] : memref<8x1xi32, #tpu.memory_space<vmem>>, vector<8x1xi32>
    %c0_17 = arith.constant 0 : index
    %c0_18 = arith.constant 0 : index
    %41 = vector.load %arg2[%c0_17, %c0_18] : memref<8x1xi32, #tpu.memory_space<vmem>>, vector<8x1xi32>
    %42 = tpu.iota {dimensions = array<i32: 1>} : vector<8x8xi32>
    %43 = vector.broadcast %40 : vector<8x1xi32> to vector<8x8xi32>
    %44 = arith.cmpi eq, %42, %43 : vector<8x8xi32>
    %45 = arith.extui %44 : vector<8x8xi1> to vector<8x8xi32>
    %46 = arith.sitofp %45 : vector<8x8xi32> to vector<8x8xf32>
    %47 = arith.truncf %46 : vector<8x8xf32> to vector<8x8xbf16>
    %48 = vector.broadcast %41 : vector<8x1xi32> to vector<8x8xi32>
    %49 = arith.cmpi eq, %42, %48 : vector<8x8xi32>
    %50 = arith.extui %49 : vector<8x8xi1> to vector<8x8xi32>
    %51 = arith.sitofp %50 : vector<8x8xi32> to vector<8x8xf32>
    %52 = arith.truncf %51 : vector<8x8xf32> to vector<8x8xbf16>
    %c0_19 = arith.constant 0 : index
    %c0_20 = arith.constant 0 : index
    %53 = vector.load %arg13[%c0_19, %c0_20] : memref<8x128xf32, #tpu.memory_space<vmem>>, vector<8x128xf32>
    %54 = arith.truncf %53 : vector<8x128xf32> to vector<8x128xbf16>
    %cst_21 = arith.constant dense<0.000000e+00> : vector<8x128xf32>
    %55 = tpu.matmul %47, %54, %cst_21 {dimension_numbers = #tpu.dot_dimension_numbers<[1], [0], [0], [1], [0, 0, 1, 1], [], []>} : vector<8x8xbf16>, vector<8x128xbf16>, vector<8x128xf32> -> vector<8x128xf32>
    %cst_22 = arith.constant dense<0.000000e+00> : vector<8x128xf32>
    %56 = tpu.matmul %52, %54, %cst_22 {dimension_numbers = #tpu.dot_dimension_numbers<[1], [0], [0], [1], [0, 0, 1, 1], [], []>} : vector<8x8xbf16>, vector<8x128xbf16>, vector<8x128xf32> -> vector<8x128xf32>
    %57 = arith.mulf %39, %55 : vector<8x128xf32>
    %58 = arith.truncf %57 : vector<8x128xf32> to vector<8x128xbf16>
    %59 = arith.mulf %39, %56 : vector<8x128xf32>
    %60 = arith.truncf %59 : vector<8x128xf32> to vector<8x128xbf16>
    %c0_23 = arith.constant 0 : index
    %c0_24 = arith.constant 0 : index
    %61 = vector.load %arg14[%c0_23, %c0_24] : memref<8x128xf32, #tpu.memory_space<vmem>>, vector<8x128xf32>
    %cst_25 = arith.constant dense<0.000000e+00> : vector<8x128xf32>
    %62 = tpu.matmul %52, %58, %cst_25 {dimension_numbers = #tpu.dot_dimension_numbers<[0], [0], [1], [1], [0, 1, 1, 1], [], []>} : vector<8x8xbf16>, vector<8x128xbf16>, vector<8x128xf32> -> vector<8x128xf32>
    %cst_26 = arith.constant dense<0.000000e+00> : vector<8x128xf32>
    %63 = tpu.matmul %47, %60, %cst_26 {dimension_numbers = #tpu.dot_dimension_numbers<[0], [0], [1], [1], [0, 1, 1, 1], [], []>} : vector<8x8xbf16>, vector<8x128xbf16>, vector<8x128xf32> -> vector<8x128xf32>
    %64 = arith.addf %62, %63 : vector<8x128xf32>
    %65 = arith.addf %61, %64 : vector<8x128xf32>
    %c0_27 = arith.constant 0 : index
    %c0_28 = arith.constant 0 : index
    %66 = vector.load %arg14[%c0_27, %c0_28] : memref<8x128xf32, #tpu.memory_space<vmem>>, vector<8x128xf32>
    tpu.vector_store %arg14[%c0_27, %c0_28], %65 {strides = array<i32>} : memref<8x128xf32, #tpu.memory_space<vmem>>, vector<8x128xf32>,
    %c1_i32 = arith.constant 1 : i32
    %67 = arith.cmpi eq, %arg0, %c1_i32 : i32
    %68 = arith.extui %67 : i1 to i32
    %c0_i32_29 = arith.constant 0 : i32
    %69 = arith.cmpi ne, %68, %c0_i32_29 : i32
    scf.if %69 {
      %c0_30 = arith.constant 0 : index
      %c0_31 = arith.constant 0 : index
      %70 = vector.load %arg14[%c0_30, %c0_31] : memref<8x128xf32, #tpu.memory_space<vmem>>, vector<8x128xf32>
      %71 = arith.truncf %70 : vector<8x128xf32> to vector<8x128xbf16>
      %c0_32 = arith.constant 0 : index
      %c0_33 = arith.constant 0 : index
      %72 = vector.load %arg10[%c0_32, %c0_33] : memref<128x128xf32, #tpu.memory_space<vmem>>, vector<128x128xf32>
      %73 = arith.truncf %72 : vector<128x128xf32> to vector<128x128xbf16>
      %cst_34 = arith.constant dense<0.000000e+00> : vector<8x128xf32>
      %74 = tpu.matmul %71, %73, %cst_34 {dimension_numbers = #tpu.dot_dimension_numbers<[1], [0], [0], [1], [0, 0, 1, 1], [], []>} : vector<8x128xbf16>, vector<128x128xbf16>, vector<8x128xf32> -> vector<8x128xf32>
      %c0_35 = arith.constant 0 : index
      %c0_36 = arith.constant 0 : index
      %75 = vector.load %arg11[%c0_35, %c0_36] : memref<1x128xf32, #tpu.memory_space<vmem>>, vector<1x128xf32>
      %76 = vector.broadcast %75 : vector<1x128xf32> to vector<8x128xf32>
      %77 = arith.addf %74, %76 : vector<8x128xf32>
      %c0_37 = arith.constant 0 : index
      %c0_38 = arith.constant 0 : index
      %78 = vector.load %arg12[%c0_37, %c0_38] : memref<8x128xf32, #tpu.memory_space<vmem>>, vector<8x128xf32>
      tpu.vector_store %arg12[%c0_37, %c0_38], %77 {strides = array<i32>} : memref<8x128xf32, #tpu.memory_space<vmem>>, vector<8x128xf32>,
    } else {
    }
    return
  }
  func.func @transform_0(%arg0: i32) -> (i32, i32) {
    %c0_i32 = arith.constant 0 : i32
    %c0_i32_0 = arith.constant 0 : i32
    return %arg0, %c0_i32 : i32, i32
  }
  func.func @transform_1(%arg0: i32) -> (i32, i32) {
    %c0_i32 = arith.constant 0 : i32
    %c0_i32_0 = arith.constant 0 : i32
    return %arg0, %c0_i32 : i32, i32
  }
  func.func @transform_2(%arg0: i32) -> (i32, i32) {
    %c0_i32 = arith.constant 0 : i32
    %c0_i32_0 = arith.constant 0 : i32
    %c0_i32_1 = arith.constant 0 : i32
    return %c0_i32, %c0_i32_0 : i32, i32
  }
  func.func @transform_3(%arg0: i32) -> (i32, i32) {
    %c0_i32 = arith.constant 0 : i32
    %c0_i32_0 = arith.constant 0 : i32
    return %arg0, %c0_i32 : i32, i32
  }
  func.func @transform_4(%arg0: i32) -> (i32, i32) {
    %c0_i32 = arith.constant 0 : i32
    %c0_i32_0 = arith.constant 0 : i32
    %c0_i32_1 = arith.constant 0 : i32
    return %c0_i32, %c0_i32_0 : i32, i32
  }
  func.func @transform_5(%arg0: i32) -> (i32, i32) {
    %c0_i32 = arith.constant 0 : i32
    %c0_i32_0 = arith.constant 0 : i32
    %c0_i32_1 = arith.constant 0 : i32
    return %c0_i32, %c0_i32_0 : i32, i32
  }
  func.func @transform_6(%arg0: i32) -> (i32, i32) {
    %c0_i32 = arith.constant 0 : i32
    %c0_i32_0 = arith.constant 0 : i32
    %c0_i32_1 = arith.constant 0 : i32
    return %c0_i32, %c0_i32_0 : i32, i32
  }
  func.func @transform_7(%arg0: i32) -> (i32, i32) {
    %c0_i32 = arith.constant 0 : i32
    %c0_i32_0 = arith.constant 0 : i32
    %c0_i32_1 = arith.constant 0 : i32
    return %c0_i32, %c0_i32_0 : i32, i32
  }
  func.func @transform_8(%arg0: i32) -> (i32, i32) {
    %c0_i32 = arith.constant 0 : i32
    %c0_i32_0 = arith.constant 0 : i32
    %c0_i32_1 = arith.constant 0 : i32
    return %c0_i32, %c0_i32_0 : i32, i32
  }
  func.func @transform_9(%arg0: i32) -> (i32, i32) {
    %c0_i32 = arith.constant 0 : i32
    %c0_i32_0 = arith.constant 0 : i32
    %c0_i32_1 = arith.constant 0 : i32
    return %c0_i32, %c0_i32_0 : i32, i32
  }
  func.func @transform_10(%arg0: i32) -> (i32, i32) {
    %c0_i32 = arith.constant 0 : i32
    %c0_i32_0 = arith.constant 0 : i32
    %c0_i32_1 = arith.constant 0 : i32
    return %c0_i32, %c0_i32_0 : i32, i32
  }
  func.func @transform_11(%arg0: i32) -> (i32, i32) {
    %c0_i32 = arith.constant 0 : i32
    %c0_i32_0 = arith.constant 0 : i32
    %c0_i32_1 = arith.constant 0 : i32
    return %c0_i32, %c0_i32_0 : i32, i32
  }
}

</mosaic_0001>

<llo_original>
// kernel: tpu_custom_call.1
$region0: #{tpu_custom_call.1}
  #allocation0 [shape = 'u32[]', space=smem, size = 0x4, offset = 0x4, fixed_abs, tag = 'smem constant byte address 0x4 - core index']
  #allocation1 [shape = 'u32[72,128]{1,0:T(1,128)}', space=vmem, size = 0x9000, scoped, tag = 'internal scratch']
  #allocation2 [shape = 'f32[8,128]{1,0:T(8,128)}', space=vmem, size = 0x1000, scoped, tag = 'scratch operand']
  #allocation3 [shape = 'f32[8,128]{1,0:T(8,128)}', space=vmem, size = 0x1000, scoped, tag = 'scratch operand']
  %s0 = inlined_call_operand.vmem [shape: s32[16,1], index: 0, kind: input, shape index: {}]
  %s1 = inlined_call_operand.vmem [shape: s32[16,1], index: 1, kind: input, shape index: {}]
  %s2 = inlined_call_operand.vmem [shape: f32[8,128], index: 2, kind: input, shape index: {}]
  %s3 = inlined_call_operand.vmem [shape: f32[16,128], index: 3, kind: input, shape index: {}]
  %s4 = inlined_call_operand.hbm [shape: f32[128,128], index: 4, kind: input, shape index: {}]
  %s5 = inlined_call_operand.hbm [shape: f32[128,128], index: 5, kind: input, shape index: {}]
  %s6 = inlined_call_operand.vmem [shape: f32[1,128], index: 6, kind: input, shape index: {}]
  %s7 = inlined_call_operand.hbm [shape: f32[128,128], index: 7, kind: input, shape index: {}]
  %s8 = inlined_call_operand.vmem [shape: f32[1,128], index: 8, kind: input, shape index: {}]
  %s9 = inlined_call_operand.hbm [shape: f32[128,128], index: 9, kind: input, shape index: {}]
  %s10 = inlined_call_operand.vmem [shape: f32[1,128], index: 10, kind: input, shape index: {}]
  %s11 = inlined_call_operand.hbm [shape: f32[8,128], index: 11, kind: output, shape index: {}]
  %s12 = sld [smem:[#allocation0]]
  $region101: #{tpu_custom_call.1} parent=0
    _
  %s14 = ssub.s32 1, %s12
  %s15 = scalar_select 0, %s14, %s12
  $region1: #{tpu_custom_call.1} parent=0
    #allocation4 [shape = 'u8[65536]{0}', space=vmem, size = 0x10000, scoped, tag = 'input window, operand 4, single buffered']
    #allocation5 [shape = 's32[2]{0}', space=sflag, size = 0x8, scoped, tag = 'scoped memory for tpu_custom_call.1']
    #allocation6 [shape = 's32[2]{0}', space=sflag, size = 0x8, scoped, tag = 'scoped memory for tpu_custom_call.1']
    #allocation7 [shape = 'u8[65536]{0}', space=vmem, size = 0x10000, scoped, tag = 'input window, operand 5, single buffered']
    #allocation8 [shape = 's32[1]{0}', space=sflag, size = 0x4, scoped, tag = 'scoped memory for tpu_custom_call.1']
    #allocation9 [shape = 'u8[65536]{0}', space=vmem, size = 0x10000, scoped, tag = 'input window, operand 7, single buffered']
    #allocation10 [shape = 'u8[65536]{0}', space=vmem, size = 0x10000, scoped, tag = 'input window, operand 9, single buffered']
    #allocation11 [shape = 's32[1]{0}', space=sflag, size = 0x4, scoped, tag = 'scoped memory for tpu_custom_call.1']
    #allocation12 [shape = 'u8[4096]{0}', space=vmem, size = 0x1000, scoped, tag = 'output window, operand 0, single buffered']
    %16 = vsyncpa [#allocation5], 0
    %17 = vsyncpa [#allocation8], 0
    %18 = vsyncpa [#allocation11], 0
    %19 = vsyncpa [#allocation6], 0
    loop: start=0, step=1, limit=4
    $region2: #{tpu_custom_call.1} parent=1 // loop_pre_header
      _
    $region3: #{tpu_custom_call.1} parent=1 // loop_header
      %s21 = sphi 0, %s25
      %p22 = scmp.ge.s32.totalorder %s21, 4
      %s31 = sphi 0, %s33
      %s34 = sphi 0, %s31
      %s35 = sphi 0, %s34
      %s51 = sphi 0, %s35
      %s57 = sphi 0, %s59
      %s60 = sphi 0, %s57
      %s61 = sphi 0, %s60
      %s77 = sphi 0, %s61
      %s81 = sphi 0, %s81
      %s83 = sphi 0, %s81
      %s84 = sphi 0, %s83
      %s98 = sphi 0, %s84
      %s104 = sphi 0, %s106
      %s107 = sphi 0, %s104
      %s108 = sphi 0, %s107
      %s124 = sphi 0, %s108
      %s128 = sphi 0, %s128
      %s130 = sphi 0, %s128
      %s131 = sphi 0, %s130
      %s145 = sphi 0, %s131
      %s149 = sphi 0, %s149
      %s151 = sphi 0, %s149
      %s152 = sphi 0, %s151
      %s166 = sphi 0, %s152
      %s170 = sphi 0, %s170
      %s172 = sphi 0, %s170
      %s173 = sphi 0, %s172
      %s187 = sphi 0, %s173
      %s191 = sphi 0, %s191
      %s193 = sphi 0, %s191
      %s194 = sphi 0, %s193
      %s208 = sphi 0, %s194
      %s212 = sphi 0, %s212
      %s214 = sphi 0, %s212
      %s215 = sphi 0, %s214
      %s229 = sphi 0, %s215
      %s233 = sphi 0, %s233
      %s235 = sphi 0, %s233
      %s236 = sphi 0, %s235
      %s250 = sphi 0, %s236
      %s254 = sphi 0, %s254
      %s256 = sphi 0, %s254
      %s257 = sphi 0, %s256
      %s271 = sphi 0, %s257
      %s275 = sphi 0, %s275
      %s277 = sphi 0, %s275
      %s278 = sphi 0, %s277
      %s292 = sphi 0, %s278
    $region4: #{tpu_custom_call.1} parent=1 // loop_header_branch
      %24 = sbr.rel (%p22) target = $region8
    $region5: #{tpu_custom_call.1} parent=1 // loop_body
      %s26 = ssub.s32 %s21, 1
      %s27 = ssub.s32 %s21, 2
      %s28 = sadd.s32 %s21, 1
      %s29 = ssub.s32 %s21, %s28
      %p30 = scmp.eq.s32.totalorder %s29, 0
      %s32 = sadd.s32 %s31, 1
      %s33 = scalar_select %p30, %s31, %s32
      %p36 = pneg %p30
      %p37 = scmp.eq.s32.totalorder %s21, 1
      %p38 = por %p36, %p37
      %p39 = scmp.ne.s32.totalorder %s31, %s34
      %p40 = scmp.eq.s32.totalorder %s21, 0
      %p41 = por %p39, %p40
      %p42 = scmp.ne.s32.totalorder %s31, %s34
      %p43 = scmp.eq.s32.totalorder %s26, 1
      %p44 = por %p42, %p43
      %p45 = scmp.ne.s32.totalorder %s34, %s35
      %p46 = scmp.eq.s32.totalorder %s26, 0
      %p47 = por %p45, %p46
      %p48 = scmp.ne.s32.totalorder %s34, %s35
      %p49 = scmp.eq.s32.totalorder %s27, 1
      %p50 = por %p48, %p49
      %p52 = scmp.ne.s32.totalorder %s35, %s51
      %p53 = scmp.eq.s32.totalorder %s27, 0
      %p54 = por %p52, %p53
      %s55 = ssub.s32 %s21, %s28
      %p56 = scmp.eq.s32.totalorder %s55, 0
      %s58 = sadd.s32 %s57, 1
      %s59 = scalar_select %p56, %s57, %s58
      %p62 = pneg %p56
      %p63 = scmp.eq.s32.totalorder %s21, 1
      %p64 = por %p62, %p63
      %p65 = scmp.ne.s32.totalorder %s57, %s60
      %p66 = scmp.eq.s32.totalorder %s21, 0
      %p67 = por %p65, %p66
      %p68 = scmp.ne.s32.totalorder %s57, %s60
      %p69 = scmp.eq.s32.totalorder %s26, 1
      %p70 = por %p68, %p69
      %p71 = scmp.ne.s32.totalorder %s60, %s61
      %p72 = scmp.eq.s32.totalorder %s26, 0
      %p73 = por %p71, %p72
      %p74 = scmp.ne.s32.totalorder %s60, %s61
      %p75 = scmp.eq.s32.totalorder %s27, 1
      %p76 = por %p74, %p75
      %p78 = scmp.ne.s32.totalorder %s61, %s77
      %p79 = scmp.eq.s32.totalorder %s27, 0
      %p80 = por %p78, %p79
      %s82 = sadd.s32 %s81, 1
      %p85 = scmp.eq.s32.totalorder %s21, 1
      %p86 = scmp.ne.s32.totalorder %s81, %s83
      %p87 = scmp.eq.s32.totalorder %s21, 0
      %p88 = por %p86, %p87
      %p89 = scmp.ne.s32.totalorder %s81, %s83
      %p90 = scmp.eq.s32.totalorder %s26, 1
      %p91 = por %p89, %p90
      %p92 = scmp.ne.s32.totalorder %s83, %s84
      %p93 = scmp.eq.s32.totalorder %s26, 0
      %p94 = por %p92, %p93
      %p95 = scmp.ne.s32.totalorder %s83, %s84
      %p96 = scmp.eq.s32.totalorder %s27, 1
      %p97 = por %p95, %p96
      %p99 = scmp.ne.s32.totalorder %s84, %s98
      %p100 = scmp.eq.s32.totalorder %s27, 0
      %p101 = por %p99, %p100
      %s102 = ssub.s32 %s21, %s28
      %p103 = scmp.eq.s32.totalorder %s102, 0
      %s105 = sadd.s32 %s104, 1
      %s106 = scalar_select %p103, %s104, %s105
      %p109 = pneg %p103
      %p110 = scmp.eq.s32.totalorder %s21, 1
      %p111 = por %p109, %p110
      %p112 = scmp.ne.s32.totalorder %s104, %s107
      %p113 = scmp.eq.s32.totalorder %s21, 0
      %p114 = por %p112, %p113
      %p115 = scmp.ne.s32.totalorder %s104, %s107
      %p116 = scmp.eq.s32.totalorder %s26, 1
      %p117 = por %p115, %p116
      %p118 = scmp.ne.s32.totalorder %s107, %s108
      %p119 = scmp.eq.s32.totalorder %s26, 0
      %p120 = por %p118, %p119
      %p121 = scmp.ne.s32.totalorder %s107, %s108
      %p122 = scmp.eq.s32.totalorder %s27, 1
      %p123 = por %p121, %p122
      %p125 = scmp.ne.s32.totalorder %s108, %s124
      %p126 = scmp.eq.s32.totalorder %s27, 0
      %p127 = por %p125, %p126
      %s129 = sadd.s32 %s128, 1
      %p132 = scmp.eq.s32.totalorder %s21, 1
      %p133 = scmp.ne.s32.totalorder %s128, %s130
      %p134 = scmp.eq.s32.totalorder %s21, 0
      %p135 = por %p133, %p134
      %p136 = scmp.ne.s32.totalorder %s128, %s130
      %p137 = scmp.eq.s32.totalorder %s26, 1
      %p138 = por %p136, %p137
      %p139 = scmp.ne.s32.totalorder %s130, %s131
      %p140 = scmp.eq.s32.totalorder %s26, 0
      %p141 = por %p139, %p140
      %p142 = scmp.ne.s32.totalorder %s130, %s131
      %p143 = scmp.eq.s32.totalorder %s27, 1
      %p144 = por %p142, %p143
      %p146 = scmp.ne.s32.totalorder %s131, %s145
      %p147 = scmp.eq.s32.totalorder %s27, 0
      %p148 = por %p146, %p147
      %s150 = sadd.s32 %s149, 1
      %p153 = scmp.eq.s32.totalorder %s21, 1
      %p154 = scmp.ne.s32.totalorder %s149, %s151
      %p155 = scmp.eq.s32.totalorder %s21, 0
      %p156 = por %p154, %p155
      %p157 = scmp.ne.s32.totalorder %s149, %s151
      %p158 = scmp.eq.s32.totalorder %s26, 1
      %p159 = por %p157, %p158
      %p160 = scmp.ne.s32.totalorder %s151, %s152
      %p161 = scmp.eq.s32.totalorder %s26, 0
      %p162 = por %p160, %p161
      %p163 = scmp.ne.s32.totalorder %s151, %s152
      %p164 = scmp.eq.s32.totalorder %s27, 1
      %p165 = por %p163, %p164
      %p167 = scmp.ne.s32.totalorder %s152, %s166
      %p168 = scmp.eq.s32.totalorder %s27, 0
      %p169 = por %p167, %p168
      %s171 = sadd.s32 %s170, 1
      %p174 = scmp.eq.s32.totalorder %s21, 1
      %p175 = scmp.ne.s32.totalorder %s170, %s172
      %p176 = scmp.eq.s32.totalorder %s21, 0
      %p177 = por %p175, %p176
      %p178 = scmp.ne.s32.totalorder %s170, %s172
      %p179 = scmp.eq.s32.totalorder %s26, 1
      %p180 = por %p178, %p179
      %p181 = scmp.ne.s32.totalorder %s172, %s173
      %p182 = scmp.eq.s32.totalorder %s26, 0
      %p183 = por %p181, %p182
      %p184 = scmp.ne.s32.totalorder %s172, %s173
      %p185 = scmp.eq.s32.totalorder %s27, 1
      %p186 = por %p184, %p185
      %p188 = scmp.ne.s32.totalorder %s173, %s187
      %p189 = scmp.eq.s32.totalorder %s27, 0
      %p190 = por %p188, %p189
      %s192 = sadd.s32 %s191, 1
      %p195 = scmp.eq.s32.totalorder %s21, 1
      %p196 = scmp.ne.s32.totalorder %s191, %s193
      %p197 = scmp.eq.s32.totalorder %s21, 0
      %p198 = por %p196, %p197
      %p199 = scmp.ne.s32.totalorder %s191, %s193
      %p200 = scmp.eq.s32.totalorder %s26, 1
      %p201 = por %p199, %p200
      %p202 = scmp.ne.s32.totalorder %s193, %s194
      %p203 = scmp.eq.s32.totalorder %s26, 0
      %p204 = por %p202, %p203
      %p205 = scmp.ne.s32.totalorder %s193, %s194
      %p206 = scmp.eq.s32.totalorder %s27, 1
      %p207 = por %p205, %p206
      %p209 = scmp.ne.s32.totalorder %s194, %s208
      %p210 = scmp.eq.s32.totalorder %s27, 0
      %p211 = por %p209, %p210
      %s213 = sadd.s32 %s212, 1
      %p216 = scmp.eq.s32.totalorder %s21, 1
      %p217 = scmp.ne.s32.totalorder %s212, %s214
      %p218 = scmp.eq.s32.totalorder %s21, 0
      %p219 = por %p217, %p218
      %p220 = scmp.ne.s32.totalorder %s212, %s214
      %p221 = scmp.eq.s32.totalorder %s26, 1
      %p222 = por %p220, %p221
      %p223 = scmp.ne.s32.totalorder %s214, %s215
      %p224 = scmp.eq.s32.totalorder %s26, 0
      %p225 = por %p223, %p224
      %p226 = scmp.ne.s32.totalorder %s214, %s215
      %p227 = scmp.eq.s32.totalorder %s27, 1
      %p228 = por %p226, %p227
      %p230 = scmp.ne.s32.totalorder %s215, %s229
      %p231 = scmp.eq.s32.totalorder %s27, 0
      %p232 = por %p230, %p231
      %s234 = sadd.s32 %s233, 1
      %p237 = scmp.eq.s32.totalorder %s21, 1
      %p238 = scmp.ne.s32.totalorder %s233, %s235
      %p239 = scmp.eq.s32.totalorder %s21, 0
      %p240 = por %p238, %p239
      %p241 = scmp.ne.s32.totalorder %s233, %s235
      %p242 = scmp.eq.s32.totalorder %s26, 1
      %p243 = por %p241, %p242
      %p244 = scmp.ne.s32.totalorder %s235, %s236
      %p245 = scmp.eq.s32.totalorder %s26, 0
      %p246 = por %p244, %p245
      %p247 = scmp.ne.s32.totalorder %s235, %s236
      %p248 = scmp.eq.s32.totalorder %s27, 1
      %p249 = por %p247, %p248
      %p251 = scmp.ne.s32.totalorder %s236, %s250
      %p252 = scmp.eq.s32.totalorder %s27, 0
      %p253 = por %p251, %p252
      %s255 = sadd.s32 %s254, 1
      %p258 = scmp.eq.s32.totalorder %s21, 1
      %p259 = scmp.ne.s32.totalorder %s254, %s256
      %p260 = scmp.eq.s32.totalorder %s21, 0
      %p261 = por %p259, %p260
      %p262 = scmp.ne.s32.totalorder %s254, %s256
      %p263 = scmp.eq.s32.totalorder %s26, 1
      %p264 = por %p262, %p263
      %p265 = scmp.ne.s32.totalorder %s256, %s257
      %p266 = scmp.eq.s32.totalorder %s26, 0
      %p267 = por %p265, %p266
      %p268 = scmp.ne.s32.totalorder %s256, %s257
      %p269 = scmp.eq.s32.totalorder %s27, 1
      %p270 = por %p268, %p269
      %p272 = scmp.ne.s32.totalorder %s257, %s271
      %p273 = scmp.eq.s32.totalorder %s27, 0
      %p274 = por %p272, %p273
      %s276 = sadd.s32 %s275, 1
      %p279 = scmp.eq.s32.totalorder %s21, 1
      %p280 = scmp.ne.s32.totalorder %s275, %s277
      %p281 = scmp.eq.s32.totalorder %s21, 0
      %p282 = por %p280, %p281
      %p283 = scmp.ne.s32.totalorder %s275, %s277
      %p284 = scmp.eq.s32.totalorder %s26, 1
      %p285 = por %p283, %p284
      %p286 = scmp.ne.s32.totalorder %s277, %s278
      %p287 = scmp.eq.s32.totalorder %s26, 0
      %p288 = por %p286, %p287
      %p289 = scmp.ne.s32.totalorder %s277, %s278
      %p290 = scmp.eq.s32.totalorder %s27, 1
      %p291 = por %p289, %p290
      %p293 = scmp.ne.s32.totalorder %s278, %s292
      %p294 = scmp.eq.s32.totalorder %s27, 0
      %p295 = por %p293, %p294
      %p296 = scmp.le.s32.totalorder 1, %s21
      %p297 = scmp.lt.s32.totalorder %s21, 3
      %p298 = pnand %p296, %p297
      %p299 = pneg %p298
      // Predicated region
      $region9: #{tpu_custom_call.1} parent=5 // pred_check
        _
      $region10: #{tpu_custom_call.1} parent=5 // pred_check_branch
        %301 = sbr.rel (%p298) target = $region12
      $region11: #{tpu_custom_call.1} parent=5 // pred_region
        %s302 = ssub.s32 %s21, 1
        // Predicated region
        $region13: #{tpu_custom_call.1} parent=11 // pred_check
          %p303 = pneg %p94
        $region14: #{tpu_custom_call.1} parent=11 // pred_check_branch
          %305 = sbr.rel (%p303) target = $region16
        $region15: #{tpu_custom_call.1} parent=11 // pred_region
          _
        $region16: #{tpu_custom_call.1} parent=11 // pred_fallthru
          _
        // Predicated region
        $region17: #{tpu_custom_call.1} parent=11 // pred_check
          %p306 = pneg %p141
        $region18: #{tpu_custom_call.1} parent=11 // pred_check_branch
          %308 = sbr.rel (%p306) target = $region20
        $region19: #{tpu_custom_call.1} parent=11 // pred_region
          %310 = vsyncadd [#allocation5], 0
          %s311 = sshll.u32 %s4, 4
          %s312 = int_to_ptr.hbm [resolvable:$true] %s311
          %s313 = sshll.u32 [#allocation4], 4
          %s314 = int_to_ptr.vmem [resolvable:$true] %s313
          %319 = dma.hbm_to_vmem [thread:$0]  %s312, 2048, %s314, [#allocation5], 128, 128, 8
        $region20: #{tpu_custom_call.1} parent=11 // pred_fallthru
          _
        // Predicated region
        $region21: #{tpu_custom_call.1} parent=11 // pred_check
          %p320 = pneg %p162
        $region22: #{tpu_custom_call.1} parent=11 // pred_check_branch
          %322 = sbr.rel (%p320) target = $region24
        $region23: #{tpu_custom_call.1} parent=11 // pred_region
          %324 = vsyncadd [#allocation8], 0
          %s325 = sshll.u32 %s5, 4
          %s326 = int_to_ptr.hbm [resolvable:$true] %s325
          %s327 = sshll.u32 [#allocation7], 4
          %s328 = int_to_ptr.vmem [resolvable:$true] %s327
          %333 = dma.hbm_to_vmem [thread:$0]  %s326, 2048, %s328, [#allocation8], 128, 128, 8
        $region24: #{tpu_custom_call.1} parent=11 // pred_fallthru
          _
        // Predicated region
        $region25: #{tpu_custom_call.1} parent=11 // pred_check
          %p334 = pneg %p183
        $region26: #{tpu_custom_call.1} parent=11 // pred_check_branch
          %336 = sbr.rel (%p334) target = $region28
        $region27: #{tpu_custom_call.1} parent=11 // pred_region
          _
        $region28: #{tpu_custom_call.1} parent=11 // pred_fallthru
          _
        // Predicated region
        $region29: #{tpu_custom_call.1} parent=11 // pred_check
          %p337 = pneg %p204
        $region30: #{tpu_custom_call.1} parent=11 // pred_check_branch
          %339 = sbr.rel (%p337) target = $region32
        $region31: #{tpu_custom_call.1} parent=11 // pred_region
          %341 = vsyncadd [#allocation8], 0
          %s342 = sshll.u32 %s7, 4
          %s343 = int_to_ptr.hbm [resolvable:$true] %s342
          %s344 = sshll.u32 [#allocation9], 4
          %s345 = int_to_ptr.vmem [resolvable:$true] %s344
          %350 = dma.hbm_to_vmem [thread:$0]  %s343, 2048, %s345, [#allocation8], 128, 128, 8
        $region32: #{tpu_custom_call.1} parent=11 // pred_fallthru
          _
        // Predicated region
        $region33: #{tpu_custom_call.1} parent=11 // pred_check
          %p351 = pneg %p225
        $region34: #{tpu_custom_call.1} parent=11 // pred_check_branch
          %353 = sbr.rel (%p351) target = $region36
        $region35: #{tpu_custom_call.1} parent=11 // pred_region
          _
        $region36: #{tpu_custom_call.1} parent=11 // pred_fallthru
          _
        // Predicated region
        $region37: #{tpu_custom_call.1} parent=11 // pred_check
          %p354 = pneg %p246
        $region38: #{tpu_custom_call.1} parent=11 // pred_check_branch
          %356 = sbr.rel (%p354) target = $region40
        $region39: #{tpu_custom_call.1} parent=11 // pred_region
          %358 = vsyncadd [#allocation11], 0
          %s359 = sshll.u32 %s9, 4
          %s360 = int_to_ptr.hbm [resolvable:$true] %s359
          %s361 = sshll.u32 [#allocation10], 4
          %s362 = int_to_ptr.vmem [resolvable:$true] %s361
          %367 = dma.hbm_to_vmem [thread:$0]  %s360, 2048, %s362, [#allocation11], 128, 128, 8
        $region40: #{tpu_custom_call.1} parent=11 // pred_fallthru
          _
        // Predicated region
        $region41: #{tpu_custom_call.1} parent=11 // pred_check
          %p368 = pneg %p267
        $region42: #{tpu_custom_call.1} parent=11 // pred_check_branch
          %370 = sbr.rel (%p368) target = $region44
        $region43: #{tpu_custom_call.1} parent=11 // pred_region
          _
        $region44: #{tpu_custom_call.1} parent=11 // pred_fallthru
          _
      $region12: #{tpu_custom_call.1} parent=5 // pred_fallthru
        _
      %p371 = scmp.lt.s32.totalorder %s21, 2
      // Predicated region
      $region45: #{tpu_custom_call.1} parent=5 // pred_check
        %p372 = pneg %p371
      $region46: #{tpu_custom_call.1} parent=5 // pred_check_branch
        %374 = sbr.rel (%p372) target = $region48
      $region47: #{tpu_custom_call.1} parent=5 // pred_region
        // Predicated region
        $region49: #{tpu_custom_call.1} parent=47 // pred_check
          %p375 = pneg %p41
        $region50: #{tpu_custom_call.1} parent=47 // pred_check_branch
          %377 = sbr.rel (%p375) target = $region52
        $region51: #{tpu_custom_call.1} parent=47 // pred_region
          %p378 = scmp.lt.s32.totalorder %s21, 1
          %s379 = scalar_select %p378, %s21, 1
          %s380 = smul.addr %s379, 8
          %s381 = scalar_lea.vmem %s0, %s380
        $region52: #{tpu_custom_call.1} parent=47 // pred_fallthru
          _
        // Predicated region
        $region53: #{tpu_custom_call.1} parent=47 // pred_check
          %p382 = pneg %p67
        $region54: #{tpu_custom_call.1} parent=47 // pred_check_branch
          %384 = sbr.rel (%p382) target = $region56
        $region55: #{tpu_custom_call.1} parent=47 // pred_region
          %p385 = scmp.lt.s32.totalorder %s21, 1
          %s386 = scalar_select %p385, %s21, 1
          %s387 = smul.addr %s386, 8
          %s388 = scalar_lea.vmem %s1, %s387
        $region56: #{tpu_custom_call.1} parent=47 // pred_fallthru
          _
        // Predicated region
        $region57: #{tpu_custom_call.1} parent=47 // pred_check
          %p389 = pneg %p114
        $region58: #{tpu_custom_call.1} parent=47 // pred_check_branch
          %391 = sbr.rel (%p389) target = $region60
        $region59: #{tpu_custom_call.1} parent=47 // pred_region
          %p392 = scmp.lt.s32.totalorder %s21, 1
          %s393 = scalar_select %p392, %s21, 1
          %s394 = smul.addr %s393, 8
          %s395 = scalar_lea.vmem %s3, %s394
        $region60: #{tpu_custom_call.1} parent=47 // pred_fallthru
          _
      $region48: #{tpu_custom_call.1} parent=5 // pred_fallthru
        _
      %p396 = scmp.le.s32.totalorder 1, %s21
      %p397 = scmp.lt.s32.totalorder %s21, 3
      %p398 = pnand %p396, %p397
      %p399 = pneg %p398
      // Predicated region
      $region61: #{tpu_custom_call.1} parent=5 // pred_check
        _
      $region62: #{tpu_custom_call.1} parent=5 // pred_check_branch
        %401 = sbr.rel (%p398) target = $region64
      $region63: #{tpu_custom_call.1} parent=5 // pred_region
        %s402 = ssub.s32 %s21, 1
        // Predicated region
        $region65: #{tpu_custom_call.1} parent=63 // pred_check
          %p403 = pneg %p141
        $region66: #{tpu_custom_call.1} parent=63 // pred_check_branch
          %405 = sbr.rel (%p403) target = $region68
        $region67: #{tpu_custom_call.1} parent=63 // pred_region
          %407 = dma.done [#allocation5], 2048
        $region68: #{tpu_custom_call.1} parent=63 // pred_fallthru
          _
        // Predicated region
        $region69: #{tpu_custom_call.1} parent=63 // pred_check
          %p408 = pneg %p162
        $region70: #{tpu_custom_call.1} parent=63 // pred_check_branch
          %410 = sbr.rel (%p408) target = $region72
        $region71: #{tpu_custom_call.1} parent=63 // pred_region
          %412 = dma.done [#allocation8], 2048
        $region72: #{tpu_custom_call.1} parent=63 // pred_fallthru
          _
        // Predicated region
        $region73: #{tpu_custom_call.1} parent=63 // pred_check
          %p413 = pneg %p204
        $region74: #{tpu_custom_call.1} parent=63 // pred_check_branch
          %415 = sbr.rel (%p413) target = $region76
        $region75: #{tpu_custom_call.1} parent=63 // pred_region
          %417 = dma.done [#allocation8], 2048
        $region76: #{tpu_custom_call.1} parent=63 // pred_fallthru
          _
        // Predicated region
        $region77: #{tpu_custom_call.1} parent=63 // pred_check
          %p418 = pneg %p246
        $region78: #{tpu_custom_call.1} parent=63 // pred_check_branch
          %420 = sbr.rel (%p418) target = $region80
        $region79: #{tpu_custom_call.1} parent=63 // pred_region
          %422 = dma.done [#allocation11], 2048
        $region80: #{tpu_custom_call.1} parent=63 // pred_fallthru
          _
        %p423 = scmp.lt.s32.totalorder %s26, 1
        %s424 = scalar_select %p423, %s26, 1
        %s425 = smul.addr %s424, 8
        %s426 = scalar_lea.vmem %s0, %s425
        %p427 = pneg %p47
        %p428 = pneg %p44
        %p429 = scmp.lt.s32.totalorder %s26, 1
        %s430 = scalar_select %p429, %s26, 1
        %s431 = smul.addr %s430, 8
        %s432 = scalar_lea.vmem %s1, %s431
        %p433 = pneg %p73
        %p434 = pneg %p70
        %p435 = pneg %p94
        %p436 = pneg %p91
        %p437 = scmp.lt.s32.totalorder %s26, 1
        %s438 = scalar_select %p437, %s26, 1
        %s439 = smul.addr %s438, 8
        %s440 = scalar_lea.vmem %s3, %s439
        %p441 = pneg %p120
        %p442 = pneg %p117
        %p443 = pneg %p141
        %p444 = pneg %p138
        %p445 = pneg %p162
        %p446 = pneg %p159
        %p447 = pneg %p183
        %p448 = pneg %p180
        %p449 = pneg %p204
        %p450 = pneg %p201
        %p451 = pneg %p225
        %p452 = pneg %p222
        %p453 = pneg %p246
        %p454 = pneg %p243
        %p455 = pneg %p267
        %p456 = pneg %p264
        %p457 = pneg %p288
        %p458 = pneg %p285
        %p459 = scmp.lt.s32.totalorder %s26, 1
        %s460 = scalar_select %p459, %s26, 1
        %s461 = smul.addr %s460, 8
        %s462 = scalar_lea.vmem %s0, %s461
        %p463 = scmp.lt.s32.totalorder %s26, 1
        %s464 = scalar_select %p463, %s26, 1
        %s465 = smul.addr %s464, 8
        %s466 = scalar_lea.vmem %s1, %s465
        %p467 = scmp.lt.s32.totalorder %s26, 1
        %s468 = scalar_select %p467, %s26, 1
        %s469 = smul.addr %s468, 8
        %s470 = scalar_lea.vmem %s3, %s469
        %p472 = scmp.eq.s32.totalorder %s26, 0
        // Predicated region
        $region81: #{tpu_custom_call.1} parent=63 // pred_check
          %p473 = pneg %p472
        $region82: #{tpu_custom_call.1} parent=63 // pred_check_branch
          %475 = sbr.rel (%p473) target = $region84
        $region83: #{tpu_custom_call.1} parent=63 // pred_region
          %v476 = vld [vmem:[%s2] sm:$0xff]
          %v477 = vpack.c.bf16 %v476, %v476
          %v478 = vld [vmem:[#allocation4] sm:$0xff]
          %v479 = vld [vmem:[#allocation4 + $0x8] sm:$0xff]
          %v480 = vld [vmem:[#allocation4 + $0x10] sm:$0xff]
          %v481 = vld [vmem:[#allocation4 + $0x18] sm:$0xff]
          %v482 = vld [vmem:[#allocation4 + $0x20] sm:$0xff]
          %v483 = vld [vmem:[#allocation4 + $0x28] sm:$0xff]
          %v484 = vld [vmem:[#allocation4 + $0x30] sm:$0xff]
          %v485 = vld [vmem:[#allocation4 + $0x38] sm:$0xff]
          %v486 = vld [vmem:[#allocation4 + $0x40] sm:$0xff]
          %v487 = vld [vmem:[#allocation4 + $0x48] sm:$0xff]
          %v488 = vld [vmem:[#allocation4 + $0x50] sm:$0xff]
          %v489 = vld [vmem:[#allocation4 + $0x58] sm:$0xff]
          %v490 = vld [vmem:[#allocation4 + $0x60] sm:$0xff]
          %v491 = vld [vmem:[#allocation4 + $0x68] sm:$0xff]
          %v492 = vld [vmem:[#allocation4 + $0x70] sm:$0xff]
          %v493 = vld [vmem:[#allocation4 + $0x78] sm:$0xff]
          %v494 = vpack.c.bf16 %v479, %v478
          %v495 = vpack.c.bf16 %v481, %v480
          %v496 = vpack.c.bf16 %v483, %v482
          %v497 = vpack.c.bf16 %v485, %v484
          %v498 = vpack.c.bf16 %v487, %v486
          %v499 = vpack.c.bf16 %v489, %v488
          %v500 = vpack.c.bf16 %v491, %v490
          %v501 = vpack.c.bf16 %v493, %v492
          %502 = vmatpush.bf16.msra.mxu0 %v501
          %503 = vmatpush.bf16.msra.mxu0 %v500
          %504 = vmatpush.bf16.msra.mxu0 %v499
          %505 = vmatpush.bf16.msra.mxu0 %v498
          %506 = vmatpush.bf16.msra.mxu0 %v497
          %507 = vmatpush.bf16.msra.mxu0 %v496
          %508 = vmatpush.bf16.msra.mxu0 %v495
          %509 = vmatpush.bf16.msra.mxu0 %v494
          %510 = vmatmul.bf16.gmra.mxu0 %v477
          %v511 = vpop.f32.mrf.mxu0
          %v512 = vadd.f32 0.0, %v511
          %v513 = vpop.f32.mrf.mxu0
          %514 = vdwg.mxu0
          %515 = vst [vmem:[#allocation2] sm:$0xff] %v512
          %516 = vst [vmem:[#allocation3] sm:$0xff] 0.0
        $region84: #{tpu_custom_call.1} parent=63 // pred_fallthru
          _
        %v517 = vld [vmem:[%s470] sm:$0xff]
        %v518 = vpack.c.bf16 %v517, %v517
        %v519 = vld [vmem:[#allocation7] sm:$0xff]
        %v520 = vld [vmem:[#allocation7 + $0x8] sm:$0xff]
        %v521 = vld [vmem:[#allocation7 + $0x10] sm:$0xff]
        %v522 = vld [vmem:[#allocation7 + $0x18] sm:$0xff]
        %v523 = vld [vmem:[#allocation7 + $0x20] sm:$0xff]
        %v524 = vld [vmem:[#allocation7 + $0x28] sm:$0xff]
        %v525 = vld [vmem:[#allocation7 + $0x30] sm:$0xff]
        %v526 = vld [vmem:[#allocation7 + $0x38] sm:$0xff]
        %v527 = vld [vmem:[#allocation7 + $0x40] sm:$0xff]
        %v528 = vld [vmem:[#allocation7 + $0x48] sm:$0xff]
        %v529 = vld [vmem:[#allocation7 + $0x50] sm:$0xff]
        %v530 = vld [vmem:[#allocation7 + $0x58] sm:$0xff]
        %v531 = vld [vmem:[#allocation7 + $0x60] sm:$0xff]
        %v532 = vld [vmem:[#allocation7 + $0x68] sm:$0xff]
        %v533 = vld [vmem:[#allocation7 + $0x70] sm:$0xff]
        %v534 = vld [vmem:[#allocation7 + $0x78] sm:$0xff]
        %v535 = vpack.c.bf16 %v520, %v519
        %v536 = vpack.c.bf16 %v522, %v521
        %v537 = vpack.c.bf16 %v524, %v523
        %v538 = vpack.c.bf16 %v526, %v525
        %v539 = vpack.c.bf16 %v528, %v527
        %v540 = vpack.c.bf16 %v530, %v529
        %v541 = vpack.c.bf16 %v532, %v531
        %v542 = vpack.c.bf16 %v534, %v533
        %v543 = vld [vmem:[%s6] sm:$0x1]
        %v545 = vperm.slane %v543, 0
        %547 = vmatpush.bf16.msra.mxu0 %v542
        %548 = vmatpush.bf16.msra.mxu0 %v541
        %549 = vmatpush.bf16.msra.mxu0 %v540
        %550 = vmatpush.bf16.msra.mxu0 %v539
        %551 = vmatpush.bf16.msra.mxu0 %v538
        %552 = vmatpush.bf16.msra.mxu0 %v537
        %553 = vmatpush.bf16.msra.mxu0 %v536
        %554 = vmatpush.bf16.msra.mxu0 %v535
        %555 = vmatmul.bf16.gmra.mxu0 %v518
        %v556 = vpop.f32.mrf.mxu0
        %v557 = vadd.f32 %v545, %v556
        %v558 = vpop.f32.mrf.mxu0
        %559 = vdwg.mxu0
        %v560 = vmax.f32 %v557, 0.0
        %v561 = vand.u32 2147483647, %v557
        %v562 = vsub.f32 0.0, %v561
        %v563 = vmul.f32 %v562, 1.442695
        %v564 = vpow.pop %v563
        %v565 = vadd.f32 %v564, 1.0
        %v566 = vlog2.pop %v565
        %v567 = vmul.f32 %v566, 0.6931472
        %v568 = vadd.f32 %v560, %v567
        %v569 = vsub.f32 %v568, 0.6931472
        %v570 = vpack.c.bf16 %v569, %v569
        %v571 = vld [vmem:[#allocation9] sm:$0xff]
        %v572 = vld [vmem:[#allocation9 + $0x8] sm:$0xff]
        %v573 = vld [vmem:[#allocation9 + $0x10] sm:$0xff]
        %v574 = vld [vmem:[#allocation9 + $0x18] sm:$0xff]
        %v575 = vld [vmem:[#allocation9 + $0x20] sm:$0xff]
        %v576 = vld [vmem:[#allocation9 + $0x28] sm:$0xff]
        %v577 = vld [vmem:[#allocation9 + $0x30] sm:$0xff]
        %v578 = vld [vmem:[#allocation9 + $0x38] sm:$0xff]
        %v579 = vld [vmem:[#allocation9 + $0x40] sm:$0xff]
        %v580 = vld [vmem:[#allocation9 + $0x48] sm:$0xff]
        %v581 = vld [vmem:[#allocation9 + $0x50] sm:$0xff]
        %v582 = vld [vmem:[#allocation9 + $0x58] sm:$0xff]
        %v583 = vld [vmem:[#allocation9 + $0x60] sm:$0xff]
        %v584 = vld [vmem:[#allocation9 + $0x68] sm:$0xff]
        %v585 = vld [vmem:[#allocation9 + $0x70] sm:$0xff]
        %v586 = vld [vmem:[#allocation9 + $0x78] sm:$0xff]
        %v587 = vpack.c.bf16 %v572, %v571
        %v588 = vpack.c.bf16 %v574, %v573
        %v589 = vpack.c.bf16 %v576, %v575
        %v590 = vpack.c.bf16 %v578, %v577
        %v591 = vpack.c.bf16 %v580, %v579
        %v592 = vpack.c.bf16 %v582, %v581
        %v593 = vpack.c.bf16 %v584, %v583
        %v594 = vpack.c.bf16 %v586, %v585
        %v595 = vld [vmem:[%s8] sm:$0x1]
        %v597 = vperm.slane %v595, 0
        %599 = vmatpush.bf16.msra.mxu0 %v594
        %600 = vmatpush.bf16.msra.mxu0 %v593
        %601 = vmatpush.bf16.msra.mxu0 %v592
        %602 = vmatpush.bf16.msra.mxu0 %v591
        %603 = vmatpush.bf16.msra.mxu0 %v590
        %604 = vmatpush.bf16.msra.mxu0 %v589
        %605 = vmatpush.bf16.msra.mxu0 %v588
        %606 = vmatpush.bf16.msra.mxu0 %v587
        %607 = vmatmul.bf16.gmra.mxu0 %v570
        %v608 = vpop.f32.mrf.mxu0
        %v609 = vadd.f32 %v597, %v608
        %v610 = vpop.f32.mrf.mxu0
        %611 = vdwg.mxu0
        %s612 = smul.u32 %s26, 8
        %v613 = vlaneseq
        %v614 = vshrl.u32 %v613, 7
        %v615 = vstv %s612
        %v616 = vadd.s32 %v615, %v614
        %vm617 = vcmp.lt.s32.totalorder %v616, 16
        %v618 = vsel %vm617, 1, 0
        %v619 = vcvt.s32.f32 %v618
        %v620 = vmul.f32 %v609, %v619
        %v621 = vld [vmem:[%s462] sm:$0xff]
        %v622 = vld [vmem:[%s466] sm:$0xff]
        %v623 = vlaneseq
        %v624 = vand.u32 %v623, 127
        %625 = vset.pattern.permute.xlu0 0
        %626 = vperm.xlu0 %625, %v621
        %v627 = vpop.permute.xlu0 %626
        %vm628 = vcmp.eq.s32.totalorder %v624, %v627
        %v629 = vsel %vm628, 1, 0
        %v630 = vcvt.s32.f32 %v629
        %v631 = vpack.c.bf16 %v630, %v630
        %632 = vset.pattern.permute.xlu0 0
        %633 = vperm.xlu0 %632, %v622
        %v634 = vpop.permute.xlu0 %633
        %vm635 = vcmp.eq.s32.totalorder %v624, %v634
        %v636 = vsel %vm635, 1, 0
        %v637 = vcvt.s32.f32 %v636
        %v638 = vpack.c.bf16 %v637, %v637
        %v639 = vld [vmem:[#allocation2] sm:$0xff]
        %v640 = vperm.slane %v639, %v627
        %v641 = vperm.slane %v639, %v634
        %v642 = vmul.f32 %v620, %v640
        %v643 = vpack.c.bf16 %v642, %v642
        %v644 = vmul.f32 %v620, %v641
        %v645 = vpack.c.bf16 %v644, %v644
        %v646 = vld [vmem:[#allocation3] sm:$0xff]
        %647 = vxpose.xlu0.c.b16.start [1/8] %v631, 128
        %648 = vxpose.xlu0.c.b16.cont [2/8] 0, 128
        %649 = vxpose.xlu0.c.b16.cont [3/8] 0, 128
        %650 = vxpose.xlu0.c.b16.cont [4/8] 0, 128
        %651 = vxpose.xlu0.c.b16.cont [5/8] 0, 128
        %652 = vxpose.xlu0.c.b16.cont [6/8] 0, 128
        %653 = vxpose.xlu0.c.b16.cont [7/8] 0, 128
        %654 = vxpose.xlu0.c.b16.end [8/8] 0, 128
        %v655 = vpop.trf.xlu0
        %v656 = vpop.trf.xlu0
        %v657 = vpop.trf.xlu0
        %v658 = vpop.trf.xlu0
        %v659 = vpop.trf.xlu0
        %v660 = vpop.trf.xlu0
        %v661 = vpop.trf.xlu0
        %v662 = vpop.trf.xlu0
        %vm663 = vcmask 64512
        %v665 = vsel %vm663, %v655, 0
        %vm667 = vcmask 1043456
        %v669 = vsel %vm667, %v645, 0
        %671 = vmatpush.bf16.msra.mxu0 0
        %672 = vmatpush.bf16.msra.mxu0 0
        %673 = vmatpush.bf16.msra.mxu0 0
        %674 = vmatpush.bf16.msra.mxu0 0
        %675 = vmatpush.bf16.msra.mxu0 0
        %676 = vmatpush.bf16.msra.mxu0 0
        %677 = vmatpush.bf16.msra.mxu0 0
        %678 = vmatpush.bf16.msra.mxu0 %v669
        %679 = vmatmul.bf16.gmra.mxu0 %v665
        %v680 = vpop.f32.mrf.mxu0
        %v681 = vadd.f32 0.0, %v680
        %v682 = vpop.f32.mrf.mxu0
        %683 = vdwg.mxu0
        %684 = vxpose.xlu0.c.b16.start [1/8] %v638, 128
        %685 = vxpose.xlu0.c.b16.cont [2/8] 0, 128
        %686 = vxpose.xlu0.c.b16.cont [3/8] 0, 128
        %687 = vxpose.xlu0.c.b16.cont [4/8] 0, 128
        %688 = vxpose.xlu0.c.b16.cont [5/8] 0, 128
        %689 = vxpose.xlu0.c.b16.cont [6/8] 0, 128
        %690 = vxpose.xlu0.c.b16.cont [7/8] 0, 128
        %691 = vxpose.xlu0.c.b16.end [8/8] 0, 128
        %v692 = vpop.trf.xlu0
        %v693 = vpop.trf.xlu0
        %v694 = vpop.trf.xlu0
        %v695 = vpop.trf.xlu0
        %v696 = vpop.trf.xlu0
        %v697 = vpop.trf.xlu0
        %v698 = vpop.trf.xlu0
        %v699 = vpop.trf.xlu0
        %v701 = vsel %vm663, %v692, 0
        %v704 = vsel %vm667, %v643, 0
        %706 = vmatpush.bf16.msra.mxu0 0
        %707 = vmatpush.bf16.msra.mxu0 0
        %708 = vmatpush.bf16.msra.mxu0 0
        %709 = vmatpush.bf16.msra.mxu0 0
        %710 = vmatpush.bf16.msra.mxu0 0
        %711 = vmatpush.bf16.msra.mxu0 0
        %712 = vmatpush.bf16.msra.mxu0 0
        %713 = vmatpush.bf16.msra.mxu0 %v704
        %714 = vmatmul.bf16.gmra.mxu0 %v701
        %v715 = vpop.f32.mrf.mxu0
        %v716 = vadd.f32 %v681, %v715
        %v717 = vpop.f32.mrf.mxu0
        %718 = vdwg.mxu0
        %v719 = vadd.f32 %v646, %v716
        %720 = vst [vmem:[#allocation3] sm:$0xff] %v719
        %p721 = scmp.eq.s32.totalorder %s26, 1
        // Predicated region
        $region85: #{tpu_custom_call.1} parent=63 // pred_check
          %p722 = pneg %p721
        $region86: #{tpu_custom_call.1} parent=63 // pred_check_branch
          %724 = sbr.rel (%p722) target = $region88
        $region87: #{tpu_custom_call.1} parent=63 // pred_region
          %v725 = vld [vmem:[#allocation3] sm:$0xff]
          %v726 = vpack.c.bf16 %v725, %v725
          %v727 = vld [vmem:[#allocation10] sm:$0xff]
          %v728 = vld [vmem:[#allocation10 + $0x8] sm:$0xff]
          %v729 = vld [vmem:[#allocation10 + $0x10] sm:$0xff]
          %v730 = vld [vmem:[#allocation10 + $0x18] sm:$0xff]
          %v731 = vld [vmem:[#allocation10 + $0x20] sm:$0xff]
          %v732 = vld [vmem:[#allocation10 + $0x28] sm:$0xff]
          %v733 = vld [vmem:[#allocation10 + $0x30] sm:$0xff]
          %v734 = vld [vmem:[#allocation10 + $0x38] sm:$0xff]
          %v735 = vld [vmem:[#allocation10 + $0x40] sm:$0xff]
          %v736 = vld [vmem:[#allocation10 + $0x48] sm:$0xff]
          %v737 = vld [vmem:[#allocation10 + $0x50] sm:$0xff]
          %v738 = vld [vmem:[#allocation10 + $0x58] sm:$0xff]
          %v739 = vld [vmem:[#allocation10 + $0x60] sm:$0xff]
          %v740 = vld [vmem:[#allocation10 + $0x68] sm:$0xff]
          %v741 = vld [vmem:[#allocation10 + $0x70] sm:$0xff]
          %v742 = vld [vmem:[#allocation10 + $0x78] sm:$0xff]
          %v743 = vpack.c.bf16 %v728, %v727
          %v744 = vpack.c.bf16 %v730, %v729
          %v745 = vpack.c.bf16 %v732, %v731
          %v746 = vpack.c.bf16 %v734, %v733
          %v747 = vpack.c.bf16 %v736, %v735
          %v748 = vpack.c.bf16 %v738, %v737
          %v749 = vpack.c.bf16 %v740, %v739
          %v750 = vpack.c.bf16 %v742, %v741
          %v751 = vld [vmem:[%s10] sm:$0x1]
          %v753 = vperm.slane %v751, 0
          %755 = vmatpush.bf16.msra.mxu0 %v750
          %756 = vmatpush.bf16.msra.mxu0 %v749
          %757 = vmatpush.bf16.msra.mxu0 %v748
          %758 = vmatpush.bf16.msra.mxu0 %v747
          %759 = vmatpush.bf16.msra.mxu0 %v746
          %760 = vmatpush.bf16.msra.mxu0 %v745
          %761 = vmatpush.bf16.msra.mxu0 %v744
          %762 = vmatpush.bf16.msra.mxu0 %v743
          %763 = vmatmul.bf16.gmra.mxu0 %v726
          %v764 = vpop.f32.mrf.mxu0
          %v765 = vadd.f32 %v753, %v764
          %v766 = vpop.f32.mrf.mxu0
          %767 = vdwg.mxu0
          %768 = vst [vmem:[#allocation12] sm:$0xff] %v765
        $region88: #{tpu_custom_call.1} parent=63 // pred_fallthru
          _
        // Predicated region
        $region89: #{tpu_custom_call.1} parent=63 // pred_check
          %p769 = pneg %p285
        $region90: #{tpu_custom_call.1} parent=63 // pred_check_branch
          %771 = sbr.rel (%p769) target = $region92
        $region91: #{tpu_custom_call.1} parent=63 // pred_region
          %773 = vsyncadd [#allocation6], 0
          %s775 = sshll.u32 [#allocation12], 4
          %s776 = int_to_ptr.vmem [resolvable:$true] %s775
          %s777 = sshll.u32 %s11, 4
          %s778 = int_to_ptr.hbm [resolvable:$true] %s777
          %780 = dma.vmem_to_hbm [thread:$0]  %s776, 128, %s778, [#allocation6]
        $region92: #{tpu_custom_call.1} parent=63 // pred_fallthru
          _
        // Predicated region
        $region93: #{tpu_custom_call.1} parent=63 // pred_check
          %p781 = pneg %p285
        $region94: #{tpu_custom_call.1} parent=63 // pred_check_branch
          %783 = sbr.rel (%p781) target = $region96
        $region95: #{tpu_custom_call.1} parent=63 // pred_region
          %785 = dma.done [#allocation6], 128
        $region96: #{tpu_custom_call.1} parent=63 // pred_fallthru
          _
      $region64: #{tpu_custom_call.1} parent=5 // pred_fallthru
        _
      %p786 = scmp.le.s32.totalorder 2, %s21
      // Predicated region
      $region97: #{tpu_custom_call.1} parent=5 // pred_check
        %p787 = pneg %p786
      $region98: #{tpu_custom_call.1} parent=5 // pred_check_branch
        %789 = sbr.rel (%p787) target = $region100
      $region99: #{tpu_custom_call.1} parent=5 // pred_region
        %s790 = ssub.s32 %s21, 2
      $region100: #{tpu_custom_call.1} parent=5 // pred_fallthru
        _
    $region6: #{tpu_custom_call.1} parent=1 // loop_footer
      %s25 = sadd.s32 1, %s21
    $region7: #{tpu_custom_call.1} parent=1 // loop_footer_branch
      %20 = sbr.rel target = $region3
    $region8: #{tpu_custom_call.1} parent=1 // loop_exit
      _
    %791 = vsyncpa [#allocation5], 1
    %s792 = scalar_lea.sflag [#allocation5], 1
    %793 = vsyncpa %s792, 1
    %794 = vsyncpa [#allocation8], 1
    %795 = vsyncpa [#allocation11], 1
    %796 = vsyncpa [#allocation6], 1
    %s797 = scalar_lea.sflag [#allocation6], 1
    %798 = vsyncpa %s797, 1

// kernel: tpu_custom_call.1
$region0: #{tpu_custom_call.1}
  #allocation0 [shape = 'u32[]', space=smem, size = 0x4, offset = 0x4, fixed_abs, tag = 'smem constant byte address 0x4 - core index']
  #allocation1 [shape = 'u32[72,128]{1,0:T(1,128)}', space=vmem, size = 0x9000, scoped, tag = 'internal scratch']
  #allocation2 [shape = 'f32[8,128]{1,0:T(8,128)}', space=vmem, size = 0x1000, scoped, tag = 'scratch operand']
  #allocation3 [shape = 'f32[8,128]{1,0:T(8,128)}', space=vmem, size = 0x1000, scoped, tag = 'scratch operand']
  %s0 = inlined_call_operand.vmem [shape: s32[16,1], index: 0, kind: input, shape index: {}]
  %s1 = inlined_call_operand.vmem [shape: s32[16,1], index: 1, kind: input, shape index: {}]
  %s2 = inlined_call_operand.vmem [shape: f32[8,128], index: 2, kind: input, shape index: {}]
  %s3 = inlined_call_operand.vmem [shape: f32[16,128], index: 3, kind: input, shape index: {}]
  %s4 = inlined_call_operand.hbm [shape: f32[128,128], index: 4, kind: input, shape index: {}]
  %s5 = inlined_call_operand.hbm [shape: f32[128,128], index: 5, kind: input, shape index: {}]
  %s6 = inlined_call_operand.vmem [shape: f32[1,128], index: 6, kind: input, shape index: {}]
  %s7 = inlined_call_operand.hbm [shape: f32[128,128], index: 7, kind: input, shape index: {}]
  %s8 = inlined_call_operand.vmem [shape: f32[1,128], index: 8, kind: input, shape index: {}]
  %s9 = inlined_call_operand.hbm [shape: f32[128,128], index: 9, kind: input, shape index: {}]
  %s10 = inlined_call_operand.vmem [shape: f32[1,128], index: 10, kind: input, shape index: {}]
  %s11 = inlined_call_operand.hbm [shape: f32[8,128], index: 11, kind: output, shape index: {}]
  %s12 = sld [smem:[#allocation0]]
  $region101: #{tpu_custom_call.1} parent=0
    _
  %s14 = ssub.s32 1, %s12
  %s15 = scalar_select 0, %s14, %s12
  $region1: #{tpu_custom_call.1} parent=0
    #allocation4 [shape = 'u8[65536]{0}', space=vmem, size = 0x10000, scoped, tag = 'input window, operand 4, single buffered']
    #allocation5 [shape = 's32[2]{0}', space=sflag, size = 0x8, scoped, tag = 'scoped memory for tpu_custom_call.1']
    #allocation6 [shape = 's32[2]{0}', space=sflag, size = 0x8, scoped, tag = 'scoped memory for tpu_custom_call.1']
    #allocation7 [shape = 'u8[65536]{0}', space=vmem, size = 0x10000, scoped, tag = 'input window, operand 5, single buffered']
    #allocation8 [shape = 's32[1]{0}', space=sflag, size = 0x4, scoped, tag = 'scoped memory for tpu_custom_call.1']
    #allocation9 [shape = 'u8[65536]{0}', space=vmem, size = 0x10000, scoped, tag = 'input window, operand 7, single buffered']
    #allocation10 [shape = 'u8[65536]{0}', space=vmem, size = 0x10000, scoped, tag = 'input window, operand 9, single buffered']
    #allocation11 [shape = 's32[1]{0}', space=sflag, size = 0x4, scoped, tag = 'scoped memory for tpu_custom_call.1']
    #allocation12 [shape = 'u8[4096]{0}', space=vmem, size = 0x1000, scoped, tag = 'output window, operand 0, single buffered']
    %16 = vsyncpa [#allocation5], 0
    %17 = vsyncpa [#allocation8], 0
    %18 = vsyncpa [#allocation11], 0
    %19 = vsyncpa [#allocation6], 0
    loop: start=0, step=1, limit=4
    $region2: #{tpu_custom_call.1} parent=1 // loop_pre_header
      _
    $region3: #{tpu_custom_call.1} parent=1 // loop_header
      %s21 = sphi 0, %s25
      %p22 = scmp.ge.s32.totalorder %s21, 4
      %s31 = sphi 0, %s33
      %s34 = sphi 0, %s31
      %s35 = sphi 0, %s34
      %s51 = sphi 0, %s35
      %s57 = sphi 0, %s59
      %s60 = sphi 0, %s57
      %s61 = sphi 0, %s60
      %s77 = sphi 0, %s61
      %s81 = sphi 0, %s81
      %s83 = sphi 0, %s81
      %s84 = sphi 0, %s83
      %s98 = sphi 0, %s84
      %s104 = sphi 0, %s106
      %s107 = sphi 0, %s104
      %s108 = sphi 0, %s107
      %s124 = sphi 0, %s108
      %s128 = sphi 0, %s128
      %s130 = sphi 0, %s128
      %s131 = sphi 0, %s130
      %s145 = sphi 0, %s131
      %s149 = sphi 0, %s149
      %s151 = sphi 0, %s149
      %s152 = sphi 0, %s151
      %s166 = sphi 0, %s152
      %s170 = sphi 0, %s170
      %s172 = sphi 0, %s170
      %s173 = sphi 0, %s172
      %s187 = sphi 0, %s173
      %s191 = sphi 0, %s191
      %s193 = sphi 0, %s191
      %s194 = sphi 0, %s193
      %s208 = sphi 0, %s194
      %s212 = sphi 0, %s212
      %s214 = sphi 0, %s212
      %s215 = sphi 0, %s214
      %s229 = sphi 0, %s215
      %s233 = sphi 0, %s233
      %s235 = sphi 0, %s233
      %s236 = sphi 0, %s235
      %s250 = sphi 0, %s236
      %s254 = sphi 0, %s254
      %s256 = sphi 0, %s254
      %s257 = sphi 0, %s256
      %s271 = sphi 0, %s257
      %s275 = sphi 0, %s275
      %s277 = sphi 0, %s275
      %s278 = sphi 0, %s277
      %s292 = sphi 0, %s278
    $region4: #{tpu_custom_call.1} parent=1 // loop_header_branch
      %24 = sbr.rel (%p22) target = $region8
    $region5: #{tpu_custom_call.1} parent=1 // loop_body
      %s26 = ssub.s32 %s21, 1
      %s27 = ssub.s32 %s21, 2
      %s28 = sadd.s32 %s21, 1
      %s29 = ssub.s32 %s21, %s28
      %p30 = scmp.eq.s32.totalorder %s29, 0
      %s32 = sadd.s32 %s31, 1
      %s33 = scalar_select %p30, %s31, %s32
      %p36 = pneg %p30
      %p37 = scmp.eq.s32.totalorder %s21, 1
      %p38 = por %p36, %p37
      %p39 = scmp.ne.s32.totalorder %s31, %s34
      %p40 = scmp.eq.s32.totalorder %s21, 0
      %p41 = por %p39, %p40
      %p42 = scmp.ne.s32.totalorder %s31, %s34
      %p43 = scmp.eq.s32.totalorder %s26, 1
      %p44 = por %p42, %p43
      %p45 = scmp.ne.s32.totalorder %s34, %s35
      %p46 = scmp.eq.s32.totalorder %s26, 0
      %p47 = por %p45, %p46
      %p48 = scmp.ne.s32.totalorder %s34, %s35
      %p49 = scmp.eq.s32.totalorder %s27, 1
      %p50 = por %p48, %p49
      %p52 = scmp.ne.s32.totalorder %s35, %s51
      %p53 = scmp.eq.s32.totalorder %s27, 0
      %p54 = por %p52, %p53
      %s55 = ssub.s32 %s21, %s28
      %p56 = scmp.eq.s32.totalorder %s55, 0
      %s58 = sadd.s32 %s57, 1
      %s59 = scalar_select %p56, %s57, %s58
      %p62 = pneg %p56
      %p63 = scmp.eq.s32.totalorder %s21, 1
      %p64 = por %p62, %p63
      %p65 = scmp.ne.s32.totalorder %s57, %s60
      %p66 = scmp.eq.s32.totalorder %s21, 0
      %p67 = por %p65, %p66
      %p68 = scmp.ne.s32.totalorder %s57, %s60
      %p69 = scmp.eq.s32.totalorder %s26, 1
      %p70 = por %p68, %p69
      %p71 = scmp.ne.s32.totalorder %s60, %s61
      %p72 = scmp.eq.s32.totalorder %s26, 0
      %p73 = por %p71, %p72
      %p74 = scmp.ne.s32.totalorder %s60, %s61
      %p75 = scmp.eq.s32.totalorder %s27, 1
      %p76 = por %p74, %p75
      %p78 = scmp.ne.s32.totalorder %s61, %s77
      %p79 = scmp.eq.s32.totalorder %s27, 0
      %p80 = por %p78, %p79
      %s82 = sadd.s32 %s81, 1
      %p85 = scmp.eq.s32.totalorder %s21, 1
      %p86 = scmp.ne.s32.totalorder %s81, %s83
      %p87 = scmp.eq.s32.totalorder %s21, 0
      %p88 = por %p86, %p87
      %p89 = scmp.ne.s32.totalorder %s81, %s83
      %p90 = scmp.eq.s32.totalorder %s26, 1
      %p91 = por %p89, %p90
      %p92 = scmp.ne.s32.totalorder %s83, %s84
      %p93 = scmp.eq.s32.totalorder %s26, 0
      %p94 = por %p92, %p93
      %p95 = scmp.ne.s32.totalorder %s83, %s84
      %p96 = scmp.eq.s32.totalorder %s27, 1
      %p97 = por %p95, %p96
      %p99 = scmp.ne.s32.totalorder %s84, %s98
      %p100 = scmp.eq.s32.totalorder %s27, 0
      %p101 = por %p99, %p100
      %s102 = ssub.s32 %s21, %s28
      %p103 = scmp.eq.s32.totalorder %s102, 0
      %s105 = sadd.s32 %s104, 1
      %s106 = scalar_select %p103, %s104, %s105
      %p109 = pneg %p103
      %p110 = scmp.eq.s32.totalorder %s21, 1
      %p111 = por %p109, %p110
      %p112 = scmp.ne.s32.totalorder %s104, %s107
      %p113 = scmp.eq.s32.totalorder %s21, 0
      %p114 = por %p112, %p113
      %p115 = scmp.ne.s32.totalorder %s104, %s107
      %p116 = scmp.eq.s32.totalorder %s26, 1
      %p117 = por %p115, %p116
      %p118 = scmp.ne.s32.totalorder %s107, %s108
      %p119 = scmp.eq.s32.totalorder %s26, 0
      %p120 = por %p118, %p119
      %p121 = scmp.ne.s32.totalorder %s107, %s108
      %p122 = scmp.eq.s32.totalorder %s27, 1
      %p123 = por %p121, %p122
      %p125 = scmp.ne.s32.totalorder %s108, %s124
      %p126 = scmp.eq.s32.totalorder %s27, 0
      %p127 = por %p125, %p126
      %s129 = sadd.s32 %s128, 1
      %p132 = scmp.eq.s32.totalorder %s21, 1
      %p133 = scmp.ne.s32.totalorder %s128, %s130
      %p134 = scmp.eq.s32.totalorder %s21, 0
      %p135 = por %p133, %p134
      %p136 = scmp.ne.s32.totalorder %s128, %s130
      %p137 = scmp.eq.s32.totalorder %s26, 1
      %p138 = por %p136, %p137
      %p139 = scmp.ne.s32.totalorder %s130, %s131
      %p140 = scmp.eq.s32.totalorder %s26, 0
      %p141 = por %p139, %p140
      %p142 = scmp.ne.s32.totalorder %s130, %s131
      %p143 = scmp.eq.s32.totalorder %s27, 1
      %p144 = por %p142, %p143
      %p146 = scmp.ne.s32.totalorder %s131, %s145
      %p147 = scmp.eq.s32.totalorder %s27, 0
      %p148 = por %p146, %p147
      %s150 = sadd.s32 %s149, 1
      %p153 = scmp.eq.s32.totalorder %s21, 1
      %p154 = scmp.ne.s32.totalorder %s149, %s151
      %p155 = scmp.eq.s32.totalorder %s21, 0
      %p156 = por %p154, %p155
      %p157 = scmp.ne.s32.totalorder %s149, %s151
      %p158 = scmp.eq.s32.totalorder %s26, 1
      %p159 = por %p157, %p158
      %p160 = scmp.ne.s32.totalorder %s151, %s152
      %p161 = scmp.eq.s32.totalorder %s26, 0
      %p162 = por %p160, %p161
      %p163 = scmp.ne.s32.totalorder %s151, %s152
      %p164 = scmp.eq.s32.totalorder %s27, 1
      %p165 = por %p163, %p164
      %p167 = scmp.ne.s32.totalorder %s152, %s166
      %p168 = scmp.eq.s32.totalorder %s27, 0
      %p169 = por %p167, %p168
      %s171 = sadd.s32 %s170, 1
      %p174 = scmp.eq.s32.totalorder %s21, 1
      %p175 = scmp.ne.s32.totalorder %s170, %s172
      %p176 = scmp.eq.s32.totalorder %s21, 0
      %p177 = por %p175, %p176
      %p178 = scmp.ne.s32.totalorder %s170, %s172
      %p179 = scmp.eq.s32.totalorder %s26, 1
      %p180 = por %p178, %p179
      %p181 = scmp.ne.s32.totalorder %s172, %s173
      %p182 = scmp.eq.s32.totalorder %s26, 0
      %p183 = por %p181, %p182
      %p184 = scmp.ne.s32.totalorder %s172, %s173
      %p185 = scmp.eq.s32.totalorder %s27, 1
      %p186 = por %p184, %p185
      %p188 = scmp.ne.s32.totalorder %s173, %s187
      %p189 = scmp.eq.s32.totalorder %s27, 0
      %p190 = por %p188, %p189
      %s192 = sadd.s32 %s191, 1
      %p195 = scmp.eq.s32.totalorder %s21, 1
      %p196 = scmp.ne.s32.totalorder %s191, %s193
      %p197 = scmp.eq.s32.totalorder %s21, 0
      %p198 = por %p196, %p197
      %p199 = scmp.ne.s32.totalorder %s191, %s193
      %p200 = scmp.eq.s32.totalorder %s26, 1
      %p201 = por %p199, %p200
      %p202 = scmp.ne.s32.totalorder %s193, %s194
      %p203 = scmp.eq.s32.totalorder %s26, 0
      %p204 = por %p202, %p203
      %p205 = scmp.ne.s32.totalorder %s193, %s194
      %p206 = scmp.eq.s32.totalorder %s27, 1
      %p207 = por %p205, %p206
      %p209 = scmp.ne.s32.totalorder %s194, %s208
      %p210 = scmp.eq.s32.totalorder %s27, 0
      %p211 = por %p209, %p210
      %s213 = sadd.s32 %s212, 1
      %p216 = scmp.eq.s32.totalorder %s21, 1
      %p217 = scmp.ne.s32.totalorder %s212, %s214
      %p218 = scmp.eq.s32.totalorder %s21, 0
      %p219 = por %p217, %p218
      %p220 = scmp.ne.s32.totalorder %s212, %s214
      %p221 = scmp.eq.s32.totalorder %s26, 1
      %p222 = por %p220, %p221
      %p223 = scmp.ne.s32.totalorder %s214, %s215
      %p224 = scmp.eq.s32.totalorder %s26, 0
      %p225 = por %p223, %p224
      %p226 = scmp.ne.s32.totalorder %s214, %s215
      %p227 = scmp.eq.s32.totalorder %s27, 1
      %p228 = por %p226, %p227
      %p230 = scmp.ne.s32.totalorder %s215, %s229
      %p231 = scmp.eq.s32.totalorder %s27, 0
      %p232 = por %p230, %p231
      %s234 = sadd.s32 %s233, 1
      %p237 = scmp.eq.s32.totalorder %s21, 1
      %p238 = scmp.ne.s32.totalorder %s233, %s235
      %p239 = scmp.eq.s32.totalorder %s21, 0
      %p240 = por %p238, %p239
      %p241 = scmp.ne.s32.totalorder %s233, %s235
      %p242 = scmp.eq.s32.totalorder %s26, 1
      %p243 = por %p241, %p242
      %p244 = scmp.ne.s32.totalorder %s235, %s236
      %p245 = scmp.eq.s32.totalorder %s26, 0
      %p246 = por %p244, %p245
      %p247 = scmp.ne.s32.totalorder %s235, %s236
      %p248 = scmp.eq.s32.totalorder %s27, 1
      %p249 = por %p247, %p248
      %p251 = scmp.ne.s32.totalorder %s236, %s250
      %p252 = scmp.eq.s32.totalorder %s27, 0
      %p253 = por %p251, %p252
      %s255 = sadd.s32 %s254, 1
      %p258 = scmp.eq.s32.totalorder %s21, 1
      %p259 = scmp.ne.s32.totalorder %s254, %s256
      %p260 = scmp.eq.s32.totalorder %s21, 0
      %p261 = por %p259, %p260
      %p262 = scmp.ne.s32.totalorder %s254, %s256
      %p263 = scmp.eq.s32.totalorder %s26, 1
      %p264 = por %p262, %p263
      %p265 = scmp.ne.s32.totalorder %s256, %s257
      %p266 = scmp.eq.s32.totalorder %s26, 0
      %p267 = por %p265, %p266
      %p268 = scmp.ne.s32.totalorder %s256, %s257
      %p269 = scmp.eq.s32.totalorder %s27, 1
      %p270 = por %p268, %p269
      %p272 = scmp.ne.s32.totalorder %s257, %s271
      %p273 = scmp.eq.s32.totalorder %s27, 0
      %p274 = por %p272, %p273
      %s276 = sadd.s32 %s275, 1
      %p279 = scmp.eq.s32.totalorder %s21, 1
      %p280 = scmp.ne.s32.totalorder %s275, %s277
      %p281 = scmp.eq.s32.totalorder %s21, 0
      %p282 = por %p280, %p281
      %p283 = scmp.ne.s32.totalorder %s275, %s277
      %p284 = scmp.eq.s32.totalorder %s26, 1
      %p285 = por %p283, %p284
      %p286 = scmp.ne.s32.totalorder %s277, %s278
      %p287 = scmp.eq.s32.totalorder %s26, 0
      %p288 = por %p286, %p287
      %p289 = scmp.ne.s32.totalorder %s277, %s278
      %p290 = scmp.eq.s32.totalorder %s27, 1
      %p291 = por %p289, %p290
      %p293 = scmp.ne.s32.totalorder %s278, %s292
      %p294 = scmp.eq.s32.totalorder %s27, 0
      %p295 = por %p293, %p294
      %p296 = scmp.le.s32.totalorder 1, %s21
      %p297 = scmp.lt.s32.totalorder %s21, 3
      %p298 = pnand %p296, %p297
      %p299 = pneg %p298
      // Predicated region
      $region9: #{tpu_custom_call.1} parent=5 // pred_check
        _
      $region10: #{tpu_custom_call.1} parent=5 // pred_check_branch
        %301 = sbr.rel (%p298) target = $region12
      $region11: #{tpu_custom_call.1} parent=5 // pred_region
        %s302 = ssub.s32 %s21, 1
        // Predicated region
        $region13: #{tpu_custom_call.1} parent=11 // pred_check
          %p303 = pneg %p94
        $region14: #{tpu_custom_call.1} parent=11 // pred_check_branch
          %305 = sbr.rel (%p303) target = $region16
        $region15: #{tpu_custom_call.1} parent=11 // pred_region
          _
        $region16: #{tpu_custom_call.1} parent=11 // pred_fallthru
          _
        // Predicated region
        $region17: #{tpu_custom_call.1} parent=11 // pred_check
          %p306 = pneg %p141
        $region18: #{tpu_custom_call.1} parent=11 // pred_check_branch
          %308 = sbr.rel (%p306) target = $region20
        $region19: #{tpu_custom_call.1} parent=11 // pred_region
          %310 = vsyncadd [#allocation5], 0
          %s311 = sshll.u32 %s4, 4
          %s312 = int_to_ptr.hbm [resolvable:$true] %s311
          %s313 = sshll.u32 [#allocation4], 4
          %s314 = int_to_ptr.vmem [resolvable:$true] %s313
          %319 = dma.hbm_to_vmem [thread:$0]  %s312, 2048, %s314, [#allocation5], 128, 128, 8
        $region20: #{tpu_custom_call.1} parent=11 // pred_fallthru
          _
        // Predicated region
        $region21: #{tpu_custom_call.1} parent=11 // pred_check
          %p320 = pneg %p162
        $region22: #{tpu_custom_call.1} parent=11 // pred_check_branch
          %322 = sbr.rel (%p320) target = $region24
        $region23: #{tpu_custom_call.1} parent=11 // pred_region
          %324 = vsyncadd [#allocation8], 0
          %s325 = sshll.u32 %s5, 4
          %s326 = int_to_ptr.hbm [resolvable:$true] %s325
          %s327 = sshll.u32 [#allocation7], 4
          %s328 = int_to_ptr.vmem [resolvable:$true] %s327
          %333 = dma.hbm_to_vmem [thread:$0]  %s326, 2048, %s328, [#allocation8], 128, 128, 8
        $region24: #{tpu_custom_call.1} parent=11 // pred_fallthru
          _
        // Predicated region
        $region25: #{tpu_custom_call.1} parent=11 // pred_check
          %p334 = pneg %p183
        $region26: #{tpu_custom_call.1} parent=11 // pred_check_branch
          %336 = sbr.rel (%p334) target = $region28
        $region27: #{tpu_custom_call.1} parent=11 // pred_region
          _
        $region28: #{tpu_custom_call.1} parent=11 // pred_fallthru
          _
        // Predicated region
        $region29: #{tpu_custom_call.1} parent=11 // pred_check
          %p337 = pneg %p204
        $region30: #{tpu_custom_call.1} parent=11 // pred_check_branch
          %339 = sbr.rel (%p337) target = $region32
        $region31: #{tpu_custom_call.1} parent=11 // pred_region
          %341 = vsyncadd [#allocation8], 0
          %s342 = sshll.u32 %s7, 4
          %s343 = int_to_ptr.hbm [resolvable:$true] %s342
          %s344 = sshll.u32 [#allocation9], 4
          %s345 = int_to_ptr.vmem [resolvable:$true] %s344
          %350 = dma.hbm_to_vmem [thread:$0]  %s343, 2048, %s345, [#allocation8], 128, 128, 8
        $region32: #{tpu_custom_call.1} parent=11 // pred_fallthru
          _
        // Predicated region
        $region33: #{tpu_custom_call.1} parent=11 // pred_check
          %p351 = pneg %p225
        $region34: #{tpu_custom_call.1} parent=11 // pred_check_branch
          %353 = sbr.rel (%p351) target = $region36
        $region35: #{tpu_custom_call.1} parent=11 // pred_region
          _
        $region36: #{tpu_custom_call.1} parent=11 // pred_fallthru
          _
        // Predicated region
        $region37: #{tpu_custom_call.1} parent=11 // pred_check
          %p354 = pneg %p246
        $region38: #{tpu_custom_call.1} parent=11 // pred_check_branch
          %356 = sbr.rel (%p354) target = $region40
        $region39: #{tpu_custom_call.1} parent=11 // pred_region
          %358 = vsyncadd [#allocation11], 0
          %s359 = sshll.u32 %s9, 4
          %s360 = int_to_ptr.hbm [resolvable:$true] %s359
          %s361 = sshll.u32 [#allocation10], 4
          %s362 = int_to_ptr.vmem [resolvable:$true] %s361
          %367 = dma.hbm_to_vmem [thread:$0]  %s360, 2048, %s362, [#allocation11], 128, 128, 8
        $region40: #{tpu_custom_call.1} parent=11 // pred_fallthru
          _
        // Predicated region
        $region41: #{tpu_custom_call.1} parent=11 // pred_check
          %p368 = pneg %p267
        $region42: #{tpu_custom_call.1} parent=11 // pred_check_branch
          %370 = sbr.rel (%p368) target = $region44
        $region43: #{tpu_custom_call.1} parent=11 // pred_region
          _
        $region44: #{tpu_custom_call.1} parent=11 // pred_fallthru
          _
      $region12: #{tpu_custom_call.1} parent=5 // pred_fallthru
        _
      %p371 = scmp.lt.s32.totalorder %s21, 2
      // Predicated region
      $region45: #{tpu_custom_call.1} parent=5 // pred_check
        %p372 = pneg %p371
      $region46: #{tpu_custom_call.1} parent=5 // pred_check_branch
        %374 = sbr.rel (%p372) target = $region48
      $region47: #{tpu_custom_call.1} parent=5 // pred_region
        // Predicated region
        $region49: #{tpu_custom_call.1} parent=47 // pred_check
          %p375 = pneg %p41
        $region50: #{tpu_custom_call.1} parent=47 // pred_check_branch
          %377 = sbr.rel (%p375) target = $region52
        $region51: #{tpu_custom_call.1} parent=47 // pred_region
          %p378 = scmp.lt.s32.totalorder %s21, 1
          %s379 = scalar_select %p378, %s21, 1
          %s380 = smul.addr %s379, 8
          %s381 = scalar_lea.vmem %s0, %s380
        $region52: #{tpu_custom_call.1} parent=47 // pred_fallthru
          _
        // Predicated region
        $region53: #{tpu_custom_call.1} parent=47 // pred_check
          %p382 = pneg %p67
        $region54: #{tpu_custom_call.1} parent=47 // pred_check_branch
          %384 = sbr.rel (%p382) target = $region56
        $region55: #{tpu_custom_call.1} parent=47 // pred_region
          %p385 = scmp.lt.s32.totalorder %s21, 1
          %s386 = scalar_select %p385, %s21, 1
          %s387 = smul.addr %s386, 8
          %s388 = scalar_lea.vmem %s1, %s387
        $region56: #{tpu_custom_call.1} parent=47 // pred_fallthru
          _
        // Predicated region
        $region57: #{tpu_custom_call.1} parent=47 // pred_check
          %p389 = pneg %p114
        $region58: #{tpu_custom_call.1} parent=47 // pred_check_branch
          %391 = sbr.rel (%p389) target = $region60
        $region59: #{tpu_custom_call.1} parent=47 // pred_region
          %p392 = scmp.lt.s32.totalorder %s21, 1
          %s393 = scalar_select %p392, %s21, 1
          %s394 = smul.addr %s393, 8
          %s395 = scalar_lea.vmem %s3, %s394
        $region60: #{tpu_custom_call.1} parent=47 // pred_fallthru
          _
      $region48: #{tpu_custom_call.1} parent=5 // pred_fallthru
        _
      %p396 = scmp.le.s32.totalorder 1, %s21
      %p397 = scmp.lt.s32.totalorder %s21, 3
      %p398 = pnand %p396, %p397
      %p399 = pneg %p398
      // Predicated region
      $region61: #{tpu_custom_call.1} parent=5 // pred_check
        _
      $region62: #{tpu_custom_call.1} parent=5 // pred_check_branch
        %401 = sbr.rel (%p398) target = $region64
      $region63: #{tpu_custom_call.1} parent=5 // pred_region
        %s402 = ssub.s32 %s21, 1
        // Predicated region
        $region65: #{tpu_custom_call.1} parent=63 // pred_check
          %p403 = pneg %p141
        $region66: #{tpu_custom_call.1} parent=63 // pred_check_branch
          %405 = sbr.rel (%p403) target = $region68
        $region67: #{tpu_custom_call.1} parent=63 // pred_region
          %407 = dma.done [#allocation5], 2048
        $region68: #{tpu_custom_call.1} parent=63 // pred_fallthru
          _
        // Predicated region
        $region69: #{tpu_custom_call.1} parent=63 // pred_check
          %p408 = pneg %p162
        $region70: #{tpu_custom_call.1} parent=63 // pred_check_branch
          %410 = sbr.rel (%p408) target = $region72
        $region71: #{tpu_custom_call.1} parent=63 // pred_region
          %412 = dma.done [#allocation8], 2048
        $region72: #{tpu_custom_call.1} parent=63 // pred_fallthru
          _
        // Predicated region
        $region73: #{tpu_custom_call.1} parent=63 // pred_check
          %p413 = pneg %p204
        $region74: #{tpu_custom_call.1} parent=63 // pred_check_branch
          %415 = sbr.rel (%p413) target = $region76
        $region75: #{tpu_custom_call.1} parent=63 // pred_region
          %417 = dma.done [#allocation8], 2048
        $region76: #{tpu_custom_call.1} parent=63 // pred_fallthru
          _
        // Predicated region
        $region77: #{tpu_custom_call.1} parent=63 // pred_check
          %p418 = pneg %p246
        $region78: #{tpu_custom_call.1} parent=63 // pred_check_branch
          %420 = sbr.rel (%p418) target = $region80
        $region79: #{tpu_custom_call.1} parent=63 // pred_region
          %422 = dma.done [#allocation11], 2048
        $region80: #{tpu_custom_call.1} parent=63 // pred_fallthru
          _
        %p423 = scmp.lt.s32.totalorder %s26, 1
        %s424 = scalar_select %p423, %s26, 1
        %s425 = smul.addr %s424, 8
        %s426 = scalar_lea.vmem %s0, %s425
        %p427 = pneg %p47
        %p428 = pneg %p44
        %p429 = scmp.lt.s32.totalorder %s26, 1
        %s430 = scalar_select %p429, %s26, 1
        %s431 = smul.addr %s430, 8
        %s432 = scalar_lea.vmem %s1, %s431
        %p433 = pneg %p73
        %p434 = pneg %p70
        %p435 = pneg %p94
        %p436 = pneg %p91
        %p437 = scmp.lt.s32.totalorder %s26, 1
        %s438 = scalar_select %p437, %s26, 1
        %s439 = smul.addr %s438, 8
        %s440 = scalar_lea.vmem %s3, %s439
        %p441 = pneg %p120
        %p442 = pneg %p117
        %p443 = pneg %p141
        %p444 = pneg %p138
        %p445 = pneg %p162
        %p446 = pneg %p159
        %p447 = pneg %p183
        %p448 = pneg %p180
        %p449 = pneg %p204
        %p450 = pneg %p201
        %p451 = pneg %p225
        %p452 = pneg %p222
        %p453 = pneg %p246
        %p454 = pneg %p243
        %p455 = pneg %p267
        %p456 = pneg %p264
        %p457 = pneg %p288
        %p458 = pneg %p285
        %p459 = scmp.lt.s32.totalorder %s26, 1
        %s460 = scalar_select %p459, %s26, 1
        %s461 = smul.addr %s460, 8
        %s462 = scalar_lea.vmem %s0, %s461
        %p463 = scmp.lt.s32.totalorder %s26, 1
        %s464 = scalar_select %p463, %s26, 1
        %s465 = smul.addr %s464, 8
        %s466 = scalar_lea.vmem %s1, %s465
        %p467 = scmp.lt.s32.totalorder %s26, 1
        %s468 = scalar_select %p467, %s26, 1
        %s469 = smul.addr %s468, 8
        %s470 = scalar_lea.vmem %s3, %s469
        %p472 = scmp.eq.s32.totalorder %s26, 0
        // Predicated region
        $region81: #{tpu_custom_call.1} parent=63 // pred_check
          %p473 = pneg %p472
        $region82: #{tpu_custom_call.1} parent=63 // pred_check_branch
          %475 = sbr.rel (%p473) target = $region84
        $region83: #{tpu_custom_call.1} parent=63 // pred_region
          %v476 = vld [vmem:[%s2] sm:$0xff]
          %v477 = vpack.c.bf16 %v476, %v476
          %v478 = vld [vmem:[#allocation4] sm:$0xff]
          %v479 = vld [vmem:[#allocation4 + $0x8] sm:$0xff]
          %v480 = vld [vmem:[#allocation4 + $0x10] sm:$0xff]
          %v481 = vld [vmem:[#allocation4 + $0x18] sm:$0xff]
          %v482 = vld [vmem:[#allocation4 + $0x20] sm:$0xff]
          %v483 = vld [vmem:[#allocation4 + $0x28] sm:$0xff]
          %v484 = vld [vmem:[#allocation4 + $0x30] sm:$0xff]
          %v485 = vld [vmem:[#allocation4 + $0x38] sm:$0xff]
          %v486 = vld [vmem:[#allocation4 + $0x40] sm:$0xff]
          %v487 = vld [vmem:[#allocation4 + $0x48] sm:$0xff]
          %v488 = vld [vmem:[#allocation4 + $0x50] sm:$0xff]
          %v489 = vld [vmem:[#allocation4 + $0x58] sm:$0xff]
          %v490 = vld [vmem:[#allocation4 + $0x60] sm:$0xff]
          %v491 = vld [vmem:[#allocation4 + $0x68] sm:$0xff]
          %v492 = vld [vmem:[#allocation4 + $0x70] sm:$0xff]
          %v493 = vld [vmem:[#allocation4 + $0x78] sm:$0xff]
          %v494 = vpack.c.bf16 %v479, %v478
          %v495 = vpack.c.bf16 %v481, %v480
          %v496 = vpack.c.bf16 %v483, %v482
          %v497 = vpack.c.bf16 %v485, %v484
          %v498 = vpack.c.bf16 %v487, %v486
          %v499 = vpack.c.bf16 %v489, %v488
          %v500 = vpack.c.bf16 %v491, %v490
          %v501 = vpack.c.bf16 %v493, %v492
          %502 = vmatpush.bf16.msra.mxu0 %v501
          %503 = vmatpush.bf16.msra.mxu0 %v500
          %504 = vmatpush.bf16.msra.mxu0 %v499
          %505 = vmatpush.bf16.msra.mxu0 %v498
          %506 = vmatpush.bf16.msra.mxu0 %v497
          %507 = vmatpush.bf16.msra.mxu0 %v496
          %508 = vmatpush.bf16.msra.mxu0 %v495
          %509 = vmatpush.bf16.msra.mxu0 %v494
          %510 = vmatmul.bf16.gmra.mxu0 %v477
          %v511 = vpop.f32.mrf.mxu0
          %v512 = vadd.f32 0.0, %v511
          %v513 = vpop.f32.mrf.mxu0
          %514 = vdwg.mxu0
          %515 = vst [vmem:[#allocation2] sm:$0xff] %v512
          %516 = vst [vmem:[#allocation3] sm:$0xff] 0.0
        $region84: #{tpu_custom_call.1} parent=63 // pred_fallthru
          _
        %v517 = vld [vmem:[%s470] sm:$0xff]
        %v518 = vpack.c.bf16 %v517, %v517
        %v519 = vld [vmem:[#allocation7] sm:$0xff]
        %v520 = vld [vmem:[#allocation7 + $0x8] sm:$0xff]
        %v521 = vld [vmem:[#allocation7 + $0x10] sm:$0xff]
        %v522 = vld [vmem:[#allocation7 + $0x18] sm:$0xff]
        %v523 = vld [vmem:[#allocation7 + $0x20] sm:$0xff]
        %v524 = vld [vmem:[#allocation7 + $0x28] sm:$0xff]
        %v525 = vld [vmem:[#allocation7 + $0x30] sm:$0xff]
        %v526 = vld [vmem:[#allocation7 + $0x38] sm:$0xff]
        %v527 = vld [vmem:[#allocation7 + $0x40] sm:$0xff]
        %v528 = vld [vmem:[#allocation7 + $0x48] sm:$0xff]
        %v529 = vld [vmem:[#allocation7 + $0x50] sm:$0xff]
        %v530 = vld [vmem:[#allocation7 + $0x58] sm:$0xff]
        %v531 = vld [vmem:[#allocation7 + $0x60] sm:$0xff]
        %v532 = vld [vmem:[#allocation7 + $0x68] sm:$0xff]
        %v533 = vld [vmem:[#allocation7 + $0x70] sm:$0xff]
        %v534 = vld [vmem:[#allocation7 + $0x78] sm:$0xff]
        %v535 = vpack.c.bf16 %v520, %v519
        %v536 = vpack.c.bf16 %v522, %v521
        %v537 = vpack.c.bf16 %v524, %v523
        %v538 = vpack.c.bf16 %v526, %v525
        %v539 = vpack.c.bf16 %v528, %v527
        %v540 = vpack.c.bf16 %v530, %v529
        %v541 = vpack.c.bf16 %v532, %v531
        %v542 = vpack.c.bf16 %v534, %v533
        %v543 = vld [vmem:[%s6] sm:$0x1]
        %v545 = vperm.slane %v543, 0
        %547 = vmatpush.bf16.msra.mxu0 %v542
        %548 = vmatpush.bf16.msra.mxu0 %v541
        %549 = vmatpush.bf16.msra.mxu0 %v540
        %550 = vmatpush.bf16.msra.mxu0 %v539
        %551 = vmatpush.bf16.msra.mxu0 %v538
        %552 = vmatpush.bf16.msra.mxu0 %v537
        %553 = vmatpush.bf16.msra.mxu0 %v536
        %554 = vmatpush.bf16.msra.mxu0 %v535
        %555 = vmatmul.bf16.gmra.mxu0 %v518
        %v556 = vpop.f32.mrf.mxu0
        %v557 = vadd.f32 %v545, %v556
        %v558 = vpop.f32.mrf.mxu0
        %559 = vdwg.mxu0
        %v560 = vmax.f32 %v557, 0.0
        %v561 = vand.u32 2147483647, %v557
        %v562 = vsub.f32 0.0, %v561
        %v563 = vmul.f32 %v562, 1.442695
        %v564 = vpow.pop %v563
        %v565 = vadd.f32 %v564, 1.0
        %v566 = vlog2.pop %v565
        %v567 = vmul.f32 %v566, 0.6931472
        %v568 = vadd.f32 %v560, %v567
        %v569 = vsub.f32 %v568, 0.6931472
        %v570 = vpack.c.bf16 %v569, %v569
        %v571 = vld [vmem:[#allocation9] sm:$0xff]
        %v572 = vld [vmem:[#allocation9 + $0x8] sm:$0xff]
        %v573 = vld [vmem:[#allocation9 + $0x10] sm:$0xff]
        %v574 = vld [vmem:[#allocation9 + $0x18] sm:$0xff]
        %v575 = vld [vmem:[#allocation9 + $0x20] sm:$0xff]
        %v576 = vld [vmem:[#allocation9 + $0x28] sm:$0xff]
        %v577 = vld [vmem:[#allocation9 + $0x30] sm:$0xff]
        %v578 = vld [vmem:[#allocation9 + $0x38] sm:$0xff]
        %v579 = vld [vmem:[#allocation9 + $0x40] sm:$0xff]
        %v580 = vld [vmem:[#allocation9 + $0x48] sm:$0xff]
        %v581 = vld [vmem:[#allocation9 + $0x50] sm:$0xff]
        %v582 = vld [vmem:[#allocation9 + $0x58] sm:$0xff]
        %v583 = vld [vmem:[#allocation9 + $0x60] sm:$0xff]
        %v584 = vld [vmem:[#allocation9 + $0x68] sm:$0xff]
        %v585 = vld [vmem:[#allocation9 + $0x70] sm:$0xff]
        %v586 = vld [vmem:[#allocation9 + $0x78] sm:$0xff]
        %v587 = vpack.c.bf16 %v572, %v571
        %v588 = vpack.c.bf16 %v574, %v573
        %v589 = vpack.c.bf16 %v576, %v575
        %v590 = vpack.c.bf16 %v578, %v577
        %v591 = vpack.c.bf16 %v580, %v579
        %v592 = vpack.c.bf16 %v582, %v581
        %v593 = vpack.c.bf16 %v584, %v583
        %v594 = vpack.c.bf16 %v586, %v585
        %v595 = vld [vmem:[%s8] sm:$0x1]
        %v597 = vperm.slane %v595, 0
        %599 = vmatpush.bf16.msra.mxu0 %v594
        %600 = vmatpush.bf16.msra.mxu0 %v593
        %601 = vmatpush.bf16.msra.mxu0 %v592
        %602 = vmatpush.bf16.msra.mxu0 %v591
        %603 = vmatpush.bf16.msra.mxu0 %v590
        %604 = vmatpush.bf16.msra.mxu0 %v589
        %605 = vmatpush.bf16.msra.mxu0 %v588
        %606 = vmatpush.bf16.msra.mxu0 %v587
        %607 = vmatmul.bf16.gmra.mxu0 %v570
        %v608 = vpop.f32.mrf.mxu0
        %v609 = vadd.f32 %v597, %v608
        %v610 = vpop.f32.mrf.mxu0
        %611 = vdwg.mxu0
        %s612 = smul.u32 %s26, 8
        %v613 = vlaneseq
        %v614 = vshrl.u32 %v613, 7
        %v615 = vstv %s612
        %v616 = vadd.s32 %v615, %v614
        %vm617 = vcmp.lt.s32.totalorder %v616, 16
        %v618 = vsel %vm617, 1, 0
        %v619 = vcvt.s32.f32 %v618
        %v620 = vmul.f32 %v609, %v619
        %v621 = vld [vmem:[%s462] sm:$0xff]
        %v622 = vld [vmem:[%s466] sm:$0xff]
        %v623 = vlaneseq
        %v624 = vand.u32 %v623, 127
        %625 = vset.pattern.permute.xlu0 0
        %626 = vperm.xlu0 %625, %v621
        %v627 = vpop.permute.xlu0 %626
        %vm628 = vcmp.eq.s32.totalorder %v624, %v627
        %v629 = vsel %vm628, 1, 0
        %v630 = vcvt.s32.f32 %v629
        %v631 = vpack.c.bf16 %v630, %v630
        %632 = vset.pattern.permute.xlu0 0
        %633 = vperm.xlu0 %632, %v622
        %v634 = vpop.permute.xlu0 %633
        %vm635 = vcmp.eq.s32.totalorder %v624, %v634
        %v636 = vsel %vm635, 1, 0
        %v637 = vcvt.s32.f32 %v636
        %v638 = vpack.c.bf16 %v637, %v637
        %v639 = vld [vmem:[#allocation2] sm:$0xff]
        %v640 = vpack.c.bf16 %v639, %v639
        %vm641 = vcmask 64512
        %v643 = vsel %vm641, %v631, 0
        %vm645 = vcmask 1043456
        %v647 = vsel %vm645, %v640, 0
        %649 = vmatpush.bf16.msra.mxu0 0
        %650 = vmatpush.bf16.msra.mxu0 0
        %651 = vmatpush.bf16.msra.mxu0 0
        %652 = vmatpush.bf16.msra.mxu0 0
        %653 = vmatpush.bf16.msra.mxu0 0
        %654 = vmatpush.bf16.msra.mxu0 0
        %655 = vmatpush.bf16.msra.mxu0 0
        %656 = vmatpush.bf16.msra.mxu0 %v647
        %657 = vmatmul.bf16.gmra.mxu0 %v643
        %v658 = vpop.f32.mrf.mxu0
        %v659 = vadd.f32 0.0, %v658
        %v660 = vpop.f32.mrf.mxu0
        %661 = vdwg.mxu0
        %v663 = vsel %vm641, %v638, 0
        %665 = vmatpush.bf16.msra.mxu0 0
        %666 = vmatpush.bf16.msra.mxu0 0
        %667 = vmatpush.bf16.msra.mxu0 0
        %668 = vmatpush.bf16.msra.mxu0 0
        %669 = vmatpush.bf16.msra.mxu0 0
        %670 = vmatpush.bf16.msra.mxu0 0
        %671 = vmatpush.bf16.msra.mxu0 0
        %672 = vmatpush.bf16.msra.mxu0 %v647
        %673 = vmatmul.bf16.gmra.mxu0 %v663
        %v674 = vpop.f32.mrf.mxu0
        %v675 = vadd.f32 0.0, %v674
        %v676 = vpop.f32.mrf.mxu0
        %677 = vdwg.mxu0
        %v678 = vmul.f32 %v620, %v659
        %v679 = vpack.c.bf16 %v678, %v678
        %v680 = vmul.f32 %v620, %v675
        %v681 = vpack.c.bf16 %v680, %v680
        %v682 = vld [vmem:[#allocation3] sm:$0xff]
        %683 = vxpose.xlu0.c.b16.start [1/8] %v631, 128
        %684 = vxpose.xlu0.c.b16.cont [2/8] 0, 128
        %685 = vxpose.xlu0.c.b16.cont [3/8] 0, 128
        %686 = vxpose.xlu0.c.b16.cont [4/8] 0, 128
        %687 = vxpose.xlu0.c.b16.cont [5/8] 0, 128
        %688 = vxpose.xlu0.c.b16.cont [6/8] 0, 128
        %689 = vxpose.xlu0.c.b16.cont [7/8] 0, 128
        %690 = vxpose.xlu0.c.b16.end [8/8] 0, 128
        %v691 = vpop.trf.xlu0
        %v692 = vpop.trf.xlu0
        %v693 = vpop.trf.xlu0
        %v694 = vpop.trf.xlu0
        %v695 = vpop.trf.xlu0
        %v696 = vpop.trf.xlu0
        %v697 = vpop.trf.xlu0
        %v698 = vpop.trf.xlu0
        %v700 = vsel %vm641, %v691, 0
        %v703 = vsel %vm645, %v681, 0
        %705 = vmatpush.bf16.msra.mxu0 0
        %706 = vmatpush.bf16.msra.mxu0 0
        %707 = vmatpush.bf16.msra.mxu0 0
        %708 = vmatpush.bf16.msra.mxu0 0
        %709 = vmatpush.bf16.msra.mxu0 0
        %710 = vmatpush.bf16.msra.mxu0 0
        %711 = vmatpush.bf16.msra.mxu0 0
        %712 = vmatpush.bf16.msra.mxu0 %v703
        %713 = vmatmul.bf16.gmra.mxu0 %v700
        %v714 = vpop.f32.mrf.mxu0
        %v715 = vadd.f32 0.0, %v714
        %v716 = vpop.f32.mrf.mxu0
        %717 = vdwg.mxu0
        %718 = vxpose.xlu0.c.b16.start [1/8] %v638, 128
        %719 = vxpose.xlu0.c.b16.cont [2/8] 0, 128
        %720 = vxpose.xlu0.c.b16.cont [3/8] 0, 128
        %721 = vxpose.xlu0.c.b16.cont [4/8] 0, 128
        %722 = vxpose.xlu0.c.b16.cont [5/8] 0, 128
        %723 = vxpose.xlu0.c.b16.cont [6/8] 0, 128
        %724 = vxpose.xlu0.c.b16.cont [7/8] 0, 128
        %725 = vxpose.xlu0.c.b16.end [8/8] 0, 128
        %v726 = vpop.trf.xlu0
        %v727 = vpop.trf.xlu0
        %v728 = vpop.trf.xlu0
        %v729 = vpop.trf.xlu0
        %v730 = vpop.trf.xlu0
        %v731 = vpop.trf.xlu0
        %v732 = vpop.trf.xlu0
        %v733 = vpop.trf.xlu0
        %v735 = vsel %vm641, %v726, 0
        %v738 = vsel %vm645, %v679, 0
        %740 = vmatpush.bf16.msra.mxu0 0
        %741 = vmatpush.bf16.msra.mxu0 0
        %742 = vmatpush.bf16.msra.mxu0 0
        %743 = vmatpush.bf16.msra.mxu0 0
        %744 = vmatpush.bf16.msra.mxu0 0
        %745 = vmatpush.bf16.msra.mxu0 0
        %746 = vmatpush.bf16.msra.mxu0 0
        %747 = vmatpush.bf16.msra.mxu0 %v738
        %748 = vmatmul.bf16.gmra.mxu0 %v735
        %v749 = vpop.f32.mrf.mxu0
        %v750 = vadd.f32 %v715, %v749
        %v751 = vpop.f32.mrf.mxu0
        %752 = vdwg.mxu0
        %v753 = vadd.f32 %v682, %v750
        %754 = vst [vmem:[#allocation3] sm:$0xff] %v753
        %p755 = scmp.eq.s32.totalorder %s26, 1
        // Predicated region
        $region85: #{tpu_custom_call.1} parent=63 // pred_check
          %p756 = pneg %p755
        $region86: #{tpu_custom_call.1} parent=63 // pred_check_branch
          %758 = sbr.rel (%p756) target = $region88
        $region87: #{tpu_custom_call.1} parent=63 // pred_region
          %v759 = vld [vmem:[#allocation3] sm:$0xff]
          %v760 = vpack.c.bf16 %v759, %v759
          %v761 = vld [vmem:[#allocation10] sm:$0xff]
          %v762 = vld [vmem:[#allocation10 + $0x8] sm:$0xff]
          %v763 = vld [vmem:[#allocation10 + $0x10] sm:$0xff]
          %v764 = vld [vmem:[#allocation10 + $0x18] sm:$0xff]
          %v765 = vld [vmem:[#allocation10 + $0x20] sm:$0xff]
          %v766 = vld [vmem:[#allocation10 + $0x28] sm:$0xff]
          %v767 = vld [vmem:[#allocation10 + $0x30] sm:$0xff]
          %v768 = vld [vmem:[#allocation10 + $0x38] sm:$0xff]
          %v769 = vld [vmem:[#allocation10 + $0x40] sm:$0xff]
          %v770 = vld [vmem:[#allocation10 + $0x48] sm:$0xff]
          %v771 = vld [vmem:[#allocation10 + $0x50] sm:$0xff]
          %v772 = vld [vmem:[#allocation10 + $0x58] sm:$0xff]
          %v773 = vld [vmem:[#allocation10 + $0x60] sm:$0xff]
          %v774 = vld [vmem:[#allocation10 + $0x68] sm:$0xff]
          %v775 = vld [vmem:[#allocation10 + $0x70] sm:$0xff]
          %v776 = vld [vmem:[#allocation10 + $0x78] sm:$0xff]
          %v777 = vpack.c.bf16 %v762, %v761
          %v778 = vpack.c.bf16 %v764, %v763
          %v779 = vpack.c.bf16 %v766, %v765
          %v780 = vpack.c.bf16 %v768, %v767
          %v781 = vpack.c.bf16 %v770, %v769
          %v782 = vpack.c.bf16 %v772, %v771
          %v783 = vpack.c.bf16 %v774, %v773
          %v784 = vpack.c.bf16 %v776, %v775
          %v785 = vld [vmem:[%s10] sm:$0x1]
          %v787 = vperm.slane %v785, 0
          %789 = vmatpush.bf16.msra.mxu0 %v784
          %790 = vmatpush.bf16.msra.mxu0 %v783
          %791 = vmatpush.bf16.msra.mxu0 %v782
          %792 = vmatpush.bf16.msra.mxu0 %v781
          %793 = vmatpush.bf16.msra.mxu0 %v780
          %794 = vmatpush.bf16.msra.mxu0 %v779
          %795 = vmatpush.bf16.msra.mxu0 %v778
          %796 = vmatpush.bf16.msra.mxu0 %v777
          %797 = vmatmul.bf16.gmra.mxu0 %v760
          %v798 = vpop.f32.mrf.mxu0
          %v799 = vadd.f32 %v787, %v798
          %v800 = vpop.f32.mrf.mxu0
          %801 = vdwg.mxu0
          %802 = vst [vmem:[#allocation12] sm:$0xff] %v799
        $region88: #{tpu_custom_call.1} parent=63 // pred_fallthru
          _
        // Predicated region
        $region89: #{tpu_custom_call.1} parent=63 // pred_check
          %p803 = pneg %p285
        $region90: #{tpu_custom_call.1} parent=63 // pred_check_branch
          %805 = sbr.rel (%p803) target = $region92
        $region91: #{tpu_custom_call.1} parent=63 // pred_region
          %807 = vsyncadd [#allocation6], 0
          %s809 = sshll.u32 [#allocation12], 4
          %s810 = int_to_ptr.vmem [resolvable:$true] %s809
          %s811 = sshll.u32 %s11, 4
          %s812 = int_to_ptr.hbm [resolvable:$true] %s811
          %814 = dma.vmem_to_hbm [thread:$0]  %s810, 128, %s812, [#allocation6]
        $region92: #{tpu_custom_call.1} parent=63 // pred_fallthru
          _
        // Predicated region
        $region93: #{tpu_custom_call.1} parent=63 // pred_check
          %p815 = pneg %p285
        $region94: #{tpu_custom_call.1} parent=63 // pred_check_branch
          %817 = sbr.rel (%p815) target = $region96
        $region95: #{tpu_custom_call.1} parent=63 // pred_region
          %819 = dma.done [#allocation6], 128
        $region96: #{tpu_custom_call.1} parent=63 // pred_fallthru
          _
      $region64: #{tpu_custom_call.1} parent=5 // pred_fallthru
        _
      %p820 = scmp.le.s32.totalorder 2, %s21
      // Predicated region
      $region97: #{tpu_custom_call.1} parent=5 // pred_check
        %p821 = pneg %p820
      $region98: #{tpu_custom_call.1} parent=5 // pred_check_branch
        %823 = sbr.rel (%p821) target = $region100
      $region99: #{tpu_custom_call.1} parent=5 // pred_region
        %s824 = ssub.s32 %s21, 2
      $region100: #{tpu_custom_call.1} parent=5 // pred_fallthru
        _
    $region6: #{tpu_custom_call.1} parent=1 // loop_footer
      %s25 = sadd.s32 1, %s21
    $region7: #{tpu_custom_call.1} parent=1 // loop_footer_branch
      %20 = sbr.rel target = $region3
    $region8: #{tpu_custom_call.1} parent=1 // loop_exit
      _
    %825 = vsyncpa [#allocation5], 1
    %s826 = scalar_lea.sflag [#allocation5], 1
    %827 = vsyncpa %s826, 1
    %828 = vsyncpa [#allocation8], 1
    %829 = vsyncpa [#allocation11], 1
    %830 = vsyncpa [#allocation6], 1
    %s831 = scalar_lea.sflag [#allocation6], 1
    %832 = vsyncpa %s831, 1

</llo_original>
